<compile_context>
chip_gen: v5e
topology: v5e:2x2
jax: 0.10.0
libtpu: 0.0.40
codegen_flags: <defaults>
</compile_context>

<pallas_src>
import functools
import math

import jax
import jax.numpy as jnp
from jax.experimental import pallas as pl
from jax.experimental.pallas import tpu as pltpu


# ----------------------------- in-kernel helpers -----------------------------

def _fast_recip(x):
    # EUP approximate reciprocal + one Newton-Raphson refinement step:
    # r <- r*(2 - x*r).  ~1e-7 relative error, keeps the divide off the VALU.
    r = pl.reciprocal(x, approx=True)
    return r * (2.0 - x * r)


def _erf(x):
    # Abramowitz & Stegun 7.1.26 rational approximation (max abs err ~1.5e-7);
    # matches exact erf (PyTorch nn.GELU default) to float32 precision.
    a1, a2, a3, a4, a5 = (0.254829592, -0.284496736, 1.421413741,
                          -1.453152027, 1.061405429)
    p = 0.3275911
    sgn = jnp.where(x >= 0.0, 1.0, -1.0)
    ax = jnp.abs(x)
    t = _fast_recip(1.0 + p * ax)
    poly = ((((a5 * t + a4) * t + a3) * t + a2) * t + a1) * t
    return sgn * (1.0 - poly * jnp.exp(-ax * ax))


def _gelu_exact(x):
    return 0.5 * x * (1.0 + _erf(x * (1.0 / math.sqrt(2.0))))


def _layernorm(x, gamma, beta, eps=1e-5):
    mean = jnp.mean(x, axis=-1, keepdims=True)
    var = jnp.mean((x - mean) ** 2, axis=-1, keepdims=True)
    return (x - mean) * jax.lax.rsqrt(var + eps) * gamma + beta


# --------------------------------- kernel ------------------------------------

def encoder_block_kernel(seqs_per_step, seq_len, num_heads,
                         x_ref, wqkv_ref, wo_ref, bo_ref,
                         w1_ref, b1_ref, w2_ref, b2_ref,
                         g1_ref, be1_ref, g2_ref, be2_ref,
                         o_ref):
    nseq, S, H = seqs_per_step, seq_len, num_heads
    x = x_ref[...]                               # (rows, E), rows = nseq * S
    rows, E = x.shape
    hd = E // H
    scale = 1.0 / math.sqrt(E)                   # module scales by sqrt(embedding_dim)

    # --- attn_norm ---
    h = _layernorm(x, g1_ref[...], be1_ref[...])

    # --- fused, full-width QKV projection: one (rows,E)x(E,3E) matmul ---
    qkv = jnp.dot(h, wqkv_ref[...], preferred_element_type=jnp.float32)

    # --- per-head scores / softmax / context ---
    # Heads enter only here (K=hd is inherent to attention); sequences within
    # the step are batched on the leading einsum dim, so no Python loop over
    # sequences and no sublane concatenate.
    ctx_heads = []
    for hidx in range(H):                        # static, small (num_heads)
        lo = hidx * hd
        qh = qkv[:, lo:lo + hd].reshape(nseq, S, hd)
        kh = qkv[:, E + lo:E + lo + hd].reshape(nseq, S, hd)
        vh = qkv[:, 2 * E + lo:2 * E + lo + hd].reshape(nseq, S, hd)
        s = jnp.einsum('bqd,bkd->bqk', qh, kh,
                       preferred_element_type=jnp.float32) * scale
        s = s - jnp.max(s, axis=-1, keepdims=True)
        p = jnp.exp(s)
        p = p * _fast_recip(jnp.sum(p, axis=-1, keepdims=True))
        ctx_h = jnp.einsum('bqk,bkd->bqd', p, vh,
                           preferred_element_type=jnp.float32)   # (nseq, S, hd)
        ctx_heads.append(ctx_h.reshape(rows, hd))
    ctx = ctx_heads[0] if H == 1 else jnp.concatenate(ctx_heads, axis=-1)

    # --- single lane-dense output projection against the 2-D wo (K=E) ---
    attn = jnp.dot(ctx, wo_ref[...], preferred_element_type=jnp.float32) + bo_ref[...]
    x2 = h + attn                                # residual on the normed input

    # --- ffn_norm + FFN + residual ---
    h2 = _layernorm(x2, g2_ref[...], be2_ref[...])
    f = jnp.dot(h2, w1_ref[...], preferred_element_type=jnp.float32) + b1_ref[...]
    f = _gelu_exact(f)
    f = jnp.dot(f, w2_ref[...], preferred_element_type=jnp.float32) + b2_ref[...]
    o_ref[...] = (h2 + f).astype(o_ref.dtype)


# -------------------------------- wrapper ------------------------------------

def _choose_seqs_per_step(batch, seq_len, target_rows=256):
    """Whole sequences per grid step, targeting ~256 rows (uniform across
    v5e/v6e/v7x): big enough to fill the MXU M dimension and reach the HBM
    roofline, small enough to keep the (rows,4E) fp32 GELU tensor in VMEM and
    keep the grid long enough for pipelining / megacore sharding."""
    nseq = max(1, min(batch, max(1, target_rows // seq_len)))
    while batch % nseq != 0:
        nseq -= 1
    return nseq


def transformer_encoder_block(x, params, num_heads, seqs_per_step=None):
    B, S, E = x.shape
    if seqs_per_step is None:
        seqs_per_step = _choose_seqs_per_step(B, S)
    if B % seqs_per_step != 0:
        seqs_per_step = 1
    rows = seqs_per_step * S
    grid = (B // seqs_per_step,)

    # Fused QKV weight (E, 3E); output projection keeps its original 2-D form.
    wqkv = jnp.concatenate([params['wq'], params['wk'], params['wv']], axis=1)
    x_flat = x.reshape(B * S, E)

    def full(shape):
        zeros = (0,) * len(shape)
        return pl.BlockSpec(shape, lambda i, _z=zeros: _z)   # constant-index block

    in_specs = [
        pl.BlockSpec((rows, E), lambda i: (i, 0)),            # x rows
        full((E, 3 * E)),                                      # wqkv
        full((E, E)), full((1, E)),                            # wo, bo
        full((E, 4 * E)), full((1, 4 * E)),                    # w1, b1
        full((4 * E, E)), full((1, E)),                        # w2, b2
        full((1, E)), full((1, E)),                            # attn_norm g/b
        full((1, E)), full((1, E)),                            # ffn_norm g/b
    ]
    out_spec = pl.BlockSpec((rows, E), lambda i: (i, 0))

    kernel = functools.partial(encoder_block_kernel, seqs_per_step, S, num_heads)

    out_flat = pl.pallas_call(
        kernel,
        out_shape=jax.ShapeDtypeStruct((B * S, E), x.dtype),
        grid_spec=pltpu.PrefetchScalarGridSpec(
            num_scalar_prefetch=0,
            grid=grid,
            in_specs=in_specs,
            out_specs=out_spec,
        ),
        compiler_params=pltpu.CompilerParams(
            dimension_semantics=("parallel",),
            vmem_limit_bytes=64 * 1024 * 1024),   # v7x physical ceiling
    )(x_flat, wqkv, params['wo'], params['bo'],
      params['w1'], params['b1'], params['w2'], params['b2'],
      params['g1'], params['be1'], params['g2'], params['be2'])
    return out_flat.reshape(B, S, E)


# ----------------------------- pure-JAX reference ----------------------------

def reference(x, params, num_heads):
    def ln(t, g, b):
        m = jnp.mean(t, -1, keepdims=True)
        v = jnp.mean((t - m) ** 2, -1, keepdims=True)
        return (t - m) / jnp.sqrt(v + 1e-5) * g + b

    B, S, E = x.shape
    hd = E // num_heads
    h = ln(x, params['g1'], params['be1'])
    q = h @ params['wq']
    k = h @ params['wk']
    v = h @ params['wv']

    def split(t):
        return t.reshape(B, S, num_heads, hd).transpose(0, 2, 1, 3)

    q, k, v = split(q), split(k), split(v)
    s = jnp.einsum('bhqd,bhkd->bhqk', q, k) / math.sqrt(E)
    p = jax.nn.softmax(s, axis=-1)
    o = jnp.einsum('bhqk,bhkd->bhqd', p, v)
    o = o.transpose(0, 2, 1, 3).reshape(B, S, E)
    o = o @ params['wo'] + params['bo']
    x2 = h + o
    h2 = ln(x2, params['g2'], params['be2'])
    f = jax.nn.gelu(h2 @ params['w1'] + params['b1'], approximate=False)
    f = f @ params['w2'] + params['b2']
    return h2 + f


# ---------------------------------- main -------------------------------------

if __name__ == "__main__":
    B, S, E, H = 2, 8, 32, 4
    key = jax.random.PRNGKey(0)
    keys = jax.random.split(key, 10)

    params = {
        'wq': jax.random.normal(keys[0], (E, E), jnp.float32) * 0.1,
        'wk': jax.random.normal(keys[1], (E, E), jnp.float32) * 0.1,
        'wv': jax.random.normal(keys[2], (E, E), jnp.float32) * 0.1,
        'wo': jax.random.normal(keys[3], (E, E), jnp.float32) * 0.1,
        'bo': jax.random.normal(keys[4], (1, E), jnp.float32) * 0.02,
        'w1': jax.random.normal(keys[5], (E, 4 * E), jnp.float32) * 0.1,
        'b1': jax.random.normal(keys[6], (1, 4 * E), jnp.float32) * 0.02,
        'w2': jax.random.normal(keys[7], (4 * E, E), jnp.float32) * 0.1,
        'b2': jax.random.normal(keys[8], (1, E), jnp.float32) * 0.02,
        'g1': jnp.ones((1, E), jnp.float32),
        'be1': jnp.zeros((1, E), jnp.float32),
        'g2': jnp.ones((1, E), jnp.float32),
        'be2': jnp.zeros((1, E), jnp.float32),
    }

    x = jax.random.normal(keys[9], (B, S, E), jnp.float32)

    out = transformer_encoder_block(x, params, H)
    out = jax.block_until_ready(out)

    ref = jax.block_until_ready(reference(x, params, H))
    assert out.shape == (B, S, E)
    assert jnp.allclose(out, ref, atol=2e-4, rtol=2e-4), (
        float(jnp.max(jnp.abs(out - ref))))

    print("KERNEL_OK")
</pallas_src>

<mosaic_0001>
module attributes {stable_mosaic.version = 11 : i64} {
  func.func @encoder_block_kernel(%arg0: i32, %arg1: memref<16x32xf32, #tpu.memory_space<vmem>>, %arg2: memref<32x96xf32, #tpu.memory_space<vmem>>, %arg3: memref<32x32xf32, #tpu.memory_space<vmem>>, %arg4: memref<1x32xf32, #tpu.memory_space<vmem>>, %arg5: memref<32x128xf32, #tpu.memory_space<vmem>>, %arg6: memref<1x128xf32, #tpu.memory_space<vmem>>, %arg7: memref<128x32xf32, #tpu.memory_space<vmem>>, %arg8: memref<1x32xf32, #tpu.memory_space<vmem>>, %arg9: memref<1x32xf32, #tpu.memory_space<vmem>>, %arg10: memref<1x32xf32, #tpu.memory_space<vmem>>, %arg11: memref<1x32xf32, #tpu.memory_space<vmem>>, %arg12: memref<1x32xf32, #tpu.memory_space<vmem>>, %arg13: memref<16x32xf32, #tpu.memory_space<vmem>>) attributes {dimension_semantics = [#tpu.dimension_semantics<parallel>], iteration_bounds = array<i64: 1>, scalar_prefetch = 0 : i64, scratch_operands = 0 : i64, tpu.core_type = #tpu.core_type<tc>, window_params = [{transform_indices = @transform_0, window_bounds = array<i64: 16, 32>}, {pipeline_mode = #tpu.pipeline_mode<synchronous>, transform_indices = @transform_1, window_bounds = array<i64: 32, 96>}, {pipeline_mode = #tpu.pipeline_mode<synchronous>, transform_indices = @transform_2, window_bounds = array<i64: 32, 32>}, {pipeline_mode = #tpu.pipeline_mode<synchronous>, transform_indices = @transform_3, window_bounds = array<i64: 1, 32>}, {pipeline_mode = #tpu.pipeline_mode<synchronous>, transform_indices = @transform_4, window_bounds = array<i64: 32, 128>}, {pipeline_mode = #tpu.pipeline_mode<synchronous>, transform_indices = @transform_5, window_bounds = array<i64: 1, 128>}, {pipeline_mode = #tpu.pipeline_mode<synchronous>, transform_indices = @transform_6, window_bounds = array<i64: 128, 32>}, {pipeline_mode = #tpu.pipeline_mode<synchronous>, transform_indices = @transform_7, window_bounds = array<i64: 1, 32>}, {pipeline_mode = #tpu.pipeline_mode<synchronous>, transform_indices = @transform_8, window_bounds = array<i64: 1, 32>}, {pipeline_mode = #tpu.pipeline_mode<synchronous>, transform_indices = @transform_9, window_bounds = array<i64: 1, 32>}, {pipeline_mode = #tpu.pipeline_mode<synchronous>, transform_indices = @transform_10, window_bounds = array<i64: 1, 32>}, {pipeline_mode = #tpu.pipeline_mode<synchronous>, transform_indices = @transform_11, window_bounds = array<i64: 1, 32>}, {transform_indices = @transform_12, window_bounds = array<i64: 16, 32>}]} {
    %c0 = arith.constant 0 : index
    %c0_0 = arith.constant 0 : index
    %0 = vector.load %arg1[%c0, %c0_0] : memref<16x32xf32, #tpu.memory_space<vmem>>, vector<16x32xf32>
    %c0_1 = arith.constant 0 : index
    %c0_2 = arith.constant 0 : index
    %1 = vector.load %arg9[%c0_1, %c0_2] : memref<1x32xf32, #tpu.memory_space<vmem>>, vector<1x32xf32>
    %c0_3 = arith.constant 0 : index
    %c0_4 = arith.constant 0 : index
    %2 = vector.load %arg10[%c0_3, %c0_4] : memref<1x32xf32, #tpu.memory_space<vmem>>, vector<1x32xf32>
    %cst = arith.constant dense<0.000000e+00> : vector<16xf32>
    %3 = vector.multi_reduction <add>, %0, %cst [1] : vector<16x32xf32> to vector<16xf32>
    %4 = vector.shape_cast %3 : vector<16xf32> to vector<16x1xf32>
    %cst_5 = arith.constant 3.200000e+01 : f32
    %5 = vector.broadcast %cst_5 : f32 to vector<16x1xf32>
    %6 = arith.divf %4, %5 : vector<16x1xf32>
    %7 = vector.broadcast %6 : vector<16x1xf32> to vector<16x32xf32>
    %8 = arith.subf %0, %7 : vector<16x32xf32>
    %9 = arith.mulf %8, %8 : vector<16x32xf32>
    %cst_6 = arith.constant dense<0.000000e+00> : vector<16xf32>
    %10 = vector.multi_reduction <add>, %9, %cst_6 [1] : vector<16x32xf32> to vector<16xf32>
    %11 = vector.shape_cast %10 : vector<16xf32> to vector<16x1xf32>
    %cst_7 = arith.constant 3.200000e+01 : f32
    %12 = vector.broadcast %cst_7 : f32 to vector<16x1xf32>
    %13 = arith.divf %11, %12 : vector<16x1xf32>
    %14 = vector.broadcast %6 : vector<16x1xf32> to vector<16x32xf32>
    %15 = arith.subf %0, %14 : vector<16x32xf32>
    %cst_8 = arith.constant 9.99999974E-6 : f32
    %16 = vector.broadcast %cst_8 : f32 to vector<16x1xf32>
    %17 = arith.addf %13, %16 : vector<16x1xf32>
    %18 = math.rsqrt %17 : vector<16x1xf32>
    %19 = vector.broadcast %18 : vector<16x1xf32> to vector<16x32xf32>
    %20 = arith.mulf %15, %19 : vector<16x32xf32>
    %21 = vector.broadcast %1 : vector<1x32xf32> to vector<16x32xf32>
    %22 = arith.mulf %20, %21 : vector<16x32xf32>
    %23 = vector.broadcast %2 : vector<1x32xf32> to vector<16x32xf32>
    %24 = arith.addf %22, %23 : vector<16x32xf32>
    %c0_9 = arith.constant 0 : index
    %c0_10 = arith.constant 0 : index
    %25 = vector.load %arg2[%c0_9, %c0_10] : memref<32x96xf32, #tpu.memory_space<vmem>>, vector<32x96xf32>
    %cst_11 = arith.constant dense<0.000000e+00> : vector<16x96xf32>
    %26 = tpu.matmul %24, %25, %cst_11 {dimension_numbers = #tpu.dot_dimension_numbers<[1], [0], [0], [1], [0, 0, 1, 1], [], []>} : vector<16x32xf32>, vector<32x96xf32>, vector<16x96xf32> -> vector<16x96xf32>
    %27 = vector.extract_strided_slice %26 {offsets = [0, 0], sizes = [16, 8], strides = [1, 1]} : vector<16x96xf32> to vector<16x8xf32>
    %28 = vector.shape_cast %27 : vector<16x8xf32> to vector<2x8x8xf32>
    %29 = vector.extract_strided_slice %26 {offsets = [0, 32], sizes = [16, 8], strides = [1, 1]} : vector<16x96xf32> to vector<16x8xf32>
    %30 = vector.shape_cast %29 : vector<16x8xf32> to vector<2x8x8xf32>
    %31 = vector.extract_strided_slice %26 {offsets = [0, 64], sizes = [16, 8], strides = [1, 1]} : vector<16x96xf32> to vector<16x8xf32>
    %32 = vector.shape_cast %31 : vector<16x8xf32> to vector<2x8x8xf32>
    "tpu.trace_start"() <{level = 10 : i32, message = "bqd,bkd->bqk"}> : () -> ()
    %cst_12 = arith.constant dense<0.000000e+00> : vector<2x8x8xf32>
    %33 = tpu.matmul %28, %30, %cst_12 {dimension_numbers = #tpu.dot_dimension_numbers<[2], [2], [1], [1], [0, 0, 0, 1, 1, 1], [0], [0]>} : vector<2x8x8xf32>, vector<2x8x8xf32>, vector<2x8x8xf32> -> vector<2x8x8xf32>
    "tpu.trace_stop"() : () -> ()
    %cst_13 = arith.constant 0.176776692 : f32
    %34 = vector.broadcast %cst_13 : f32 to vector<2x8x8xf32>
    %35 = arith.mulf %33, %34 : vector<2x8x8xf32>
    %cst_14 = arith.constant dense<0xFF800000> : vector<2x8xf32>
    %36 = vector.multi_reduction <maximumf>, %35, %cst_14 [2] : vector<2x8x8xf32> to vector<2x8xf32>
    %37 = vector.shape_cast %36 : vector<2x8xf32> to vector<2x8x1xf32>
    %38 = vector.broadcast %37 : vector<2x8x1xf32> to vector<2x8x8xf32>
    %39 = arith.subf %35, %38 : vector<2x8x8xf32>
    %40 = math.exp %39 : vector<2x8x8xf32>
    %cst_15 = arith.constant dense<0.000000e+00> : vector<2x8xf32>
    %41 = vector.multi_reduction <add>, %40, %cst_15 [2] : vector<2x8x8xf32> to vector<2x8xf32>
    %42 = vector.shape_cast %41 : vector<2x8xf32> to vector<2x8x1xf32>
    %43 = tpu.reciprocal %42 {approx = true} : vector<2x8x1xf32> -> vector<2x8x1xf32>
    %44 = arith.mulf %42, %43 : vector<2x8x1xf32>
    %cst_16 = arith.constant 2.000000e+00 : f32
    %45 = vector.broadcast %cst_16 : f32 to vector<2x8x1xf32>
    %46 = arith.subf %45, %44 : vector<2x8x1xf32>
    %47 = arith.mulf %43, %46 : vector<2x8x1xf32>
    %48 = vector.broadcast %47 : vector<2x8x1xf32> to vector<2x8x8xf32>
    %49 = arith.mulf %40, %48 : vector<2x8x8xf32>
    "tpu.trace_start"() <{level = 10 : i32, message = "bqk,bkd->bqd"}> : () -> ()
    %cst_17 = arith.constant dense<0.000000e+00> : vector<2x8x8xf32>
    %50 = tpu.matmul %49, %32, %cst_17 {dimension_numbers = #tpu.dot_dimension_numbers<[2], [1], [1], [2], [0, 0, 0, 1, 1, 2], [0], [0]>} : vector<2x8x8xf32>, vector<2x8x8xf32>, vector<2x8x8xf32> -> vector<2x8x8xf32>
    "tpu.trace_stop"() : () -> ()
    %51 = vector.shape_cast %50 : vector<2x8x8xf32> to vector<16x8xf32>
    %52 = vector.extract_strided_slice %26 {offsets = [0, 8], sizes = [16, 8], strides = [1, 1]} : vector<16x96xf32> to vector<16x8xf32>
    %53 = vector.shape_cast %52 : vector<16x8xf32> to vector<2x8x8xf32>
    %54 = vector.extract_strided_slice %26 {offsets = [0, 40], sizes = [16, 8], strides = [1, 1]} : vector<16x96xf32> to vector<16x8xf32>
    %55 = vector.shape_cast %54 : vector<16x8xf32> to vector<2x8x8xf32>
    %56 = vector.extract_strided_slice %26 {offsets = [0, 72], sizes = [16, 8], strides = [1, 1]} : vector<16x96xf32> to vector<16x8xf32>
    %57 = vector.shape_cast %56 : vector<16x8xf32> to vector<2x8x8xf32>
    "tpu.trace_start"() <{level = 10 : i32, message = "bqd,bkd->bqk"}> : () -> ()
    %cst_18 = arith.constant dense<0.000000e+00> : vector<2x8x8xf32>
    %58 = tpu.matmul %53, %55, %cst_18 {dimension_numbers = #tpu.dot_dimension_numbers<[2], [2], [1], [1], [0, 0, 0, 1, 1, 1], [0], [0]>} : vector<2x8x8xf32>, vector<2x8x8xf32>, vector<2x8x8xf32> -> vector<2x8x8xf32>
    "tpu.trace_stop"() : () -> ()
    %cst_19 = arith.constant 0.176776692 : f32
    %59 = vector.broadcast %cst_19 : f32 to vector<2x8x8xf32>
    %60 = arith.mulf %58, %59 : vector<2x8x8xf32>
    %cst_20 = arith.constant dense<0xFF800000> : vector<2x8xf32>
    %61 = vector.multi_reduction <maximumf>, %60, %cst_20 [2] : vector<2x8x8xf32> to vector<2x8xf32>
    %62 = vector.shape_cast %61 : vector<2x8xf32> to vector<2x8x1xf32>
    %63 = vector.broadcast %62 : vector<2x8x1xf32> to vector<2x8x8xf32>
    %64 = arith.subf %60, %63 : vector<2x8x8xf32>
    %65 = math.exp %64 : vector<2x8x8xf32>
    %cst_21 = arith.constant dense<0.000000e+00> : vector<2x8xf32>
    %66 = vector.multi_reduction <add>, %65, %cst_21 [2] : vector<2x8x8xf32> to vector<2x8xf32>
    %67 = vector.shape_cast %66 : vector<2x8xf32> to vector<2x8x1xf32>
    %68 = tpu.reciprocal %67 {approx = true} : vector<2x8x1xf32> -> vector<2x8x1xf32>
    %69 = arith.mulf %67, %68 : vector<2x8x1xf32>
    %cst_22 = arith.constant 2.000000e+00 : f32
    %70 = vector.broadcast %cst_22 : f32 to vector<2x8x1xf32>
    %71 = arith.subf %70, %69 : vector<2x8x1xf32>
    %72 = arith.mulf %68, %71 : vector<2x8x1xf32>
    %73 = vector.broadcast %72 : vector<2x8x1xf32> to vector<2x8x8xf32>
    %74 = arith.mulf %65, %73 : vector<2x8x8xf32>
    "tpu.trace_start"() <{level = 10 : i32, message = "bqk,bkd->bqd"}> : () -> ()
    %cst_23 = arith.constant dense<0.000000e+00> : vector<2x8x8xf32>
    %75 = tpu.matmul %74, %57, %cst_23 {dimension_numbers = #tpu.dot_dimension_numbers<[2], [1], [1], [2], [0, 0, 0, 1, 1, 2], [0], [0]>} : vector<2x8x8xf32>, vector<2x8x8xf32>, vector<2x8x8xf32> -> vector<2x8x8xf32>
    "tpu.trace_stop"() : () -> ()
    %76 = vector.shape_cast %75 : vector<2x8x8xf32> to vector<16x8xf32>
    %77 = vector.extract_strided_slice %26 {offsets = [0, 16], sizes = [16, 8], strides = [1, 1]} : vector<16x96xf32> to vector<16x8xf32>
    %78 = vector.shape_cast %77 : vector<16x8xf32> to vector<2x8x8xf32>
    %79 = vector.extract_strided_slice %26 {offsets = [0, 48], sizes = [16, 8], strides = [1, 1]} : vector<16x96xf32> to vector<16x8xf32>
    %80 = vector.shape_cast %79 : vector<16x8xf32> to vector<2x8x8xf32>
    %81 = vector.extract_strided_slice %26 {offsets = [0, 80], sizes = [16, 8], strides = [1, 1]} : vector<16x96xf32> to vector<16x8xf32>
    %82 = vector.shape_cast %81 : vector<16x8xf32> to vector<2x8x8xf32>
    "tpu.trace_start"() <{level = 10 : i32, message = "bqd,bkd->bqk"}> : () -> ()
    %cst_24 = arith.constant dense<0.000000e+00> : vector<2x8x8xf32>
    %83 = tpu.matmul %78, %80, %cst_24 {dimension_numbers = #tpu.dot_dimension_numbers<[2], [2], [1], [1], [0, 0, 0, 1, 1, 1], [0], [0]>} : vector<2x8x8xf32>, vector<2x8x8xf32>, vector<2x8x8xf32> -> vector<2x8x8xf32>
    "tpu.trace_stop"() : () -> ()
    %cst_25 = arith.constant 0.176776692 : f32
    %84 = vector.broadcast %cst_25 : f32 to vector<2x8x8xf32>
    %85 = arith.mulf %83, %84 : vector<2x8x8xf32>
    %cst_26 = arith.constant dense<0xFF800000> : vector<2x8xf32>
    %86 = vector.multi_reduction <maximumf>, %85, %cst_26 [2] : vector<2x8x8xf32> to vector<2x8xf32>
    %87 = vector.shape_cast %86 : vector<2x8xf32> to vector<2x8x1xf32>
    %88 = vector.broadcast %87 : vector<2x8x1xf32> to vector<2x8x8xf32>
    %89 = arith.subf %85, %88 : vector<2x8x8xf32>
    %90 = math.exp %89 : vector<2x8x8xf32>
    %cst_27 = arith.constant dense<0.000000e+00> : vector<2x8xf32>
    %91 = vector.multi_reduction <add>, %90, %cst_27 [2] : vector<2x8x8xf32> to vector<2x8xf32>
    %92 = vector.shape_cast %91 : vector<2x8xf32> to vector<2x8x1xf32>
    %93 = tpu.reciprocal %92 {approx = true} : vector<2x8x1xf32> -> vector<2x8x1xf32>
    %94 = arith.mulf %92, %93 : vector<2x8x1xf32>
    %cst_28 = arith.constant 2.000000e+00 : f32
    %95 = vector.broadcast %cst_28 : f32 to vector<2x8x1xf32>
    %96 = arith.subf %95, %94 : vector<2x8x1xf32>
    %97 = arith.mulf %93, %96 : vector<2x8x1xf32>
    %98 = vector.broadcast %97 : vector<2x8x1xf32> to vector<2x8x8xf32>
    %99 = arith.mulf %90, %98 : vector<2x8x8xf32>
    "tpu.trace_start"() <{level = 10 : i32, message = "bqk,bkd->bqd"}> : () -> ()
    %cst_29 = arith.constant dense<0.000000e+00> : vector<2x8x8xf32>
    %100 = tpu.matmul %99, %82, %cst_29 {dimension_numbers = #tpu.dot_dimension_numbers<[2], [1], [1], [2], [0, 0, 0, 1, 1, 2], [0], [0]>} : vector<2x8x8xf32>, vector<2x8x8xf32>, vector<2x8x8xf32> -> vector<2x8x8xf32>
    "tpu.trace_stop"() : () -> ()
    %101 = vector.shape_cast %100 : vector<2x8x8xf32> to vector<16x8xf32>
    %102 = vector.extract_strided_slice %26 {offsets = [0, 24], sizes = [16, 8], strides = [1, 1]} : vector<16x96xf32> to vector<16x8xf32>
    %103 = vector.shape_cast %102 : vector<16x8xf32> to vector<2x8x8xf32>
    %104 = vector.extract_strided_slice %26 {offsets = [0, 56], sizes = [16, 8], strides = [1, 1]} : vector<16x96xf32> to vector<16x8xf32>
    %105 = vector.shape_cast %104 : vector<16x8xf32> to vector<2x8x8xf32>
    %106 = vector.extract_strided_slice %26 {offsets = [0, 88], sizes = [16, 8], strides = [1, 1]} : vector<16x96xf32> to vector<16x8xf32>
    %107 = vector.shape_cast %106 : vector<16x8xf32> to vector<2x8x8xf32>
    "tpu.trace_start"() <{level = 10 : i32, message = "bqd,bkd->bqk"}> : () -> ()
    %cst_30 = arith.constant dense<0.000000e+00> : vector<2x8x8xf32>
    %108 = tpu.matmul %103, %105, %cst_30 {dimension_numbers = #tpu.dot_dimension_numbers<[2], [2], [1], [1], [0, 0, 0, 1, 1, 1], [0], [0]>} : vector<2x8x8xf32>, vector<2x8x8xf32>, vector<2x8x8xf32> -> vector<2x8x8xf32>
    "tpu.trace_stop"() : () -> ()
    %cst_31 = arith.constant 0.176776692 : f32
    %109 = vector.broadcast %cst_31 : f32 to vector<2x8x8xf32>
    %110 = arith.mulf %108, %109 : vector<2x8x8xf32>
    %cst_32 = arith.constant dense<0xFF800000> : vector<2x8xf32>
    %111 = vector.multi_reduction <maximumf>, %110, %cst_32 [2] : vector<2x8x8xf32> to vector<2x8xf32>
    %112 = vector.shape_cast %111 : vector<2x8xf32> to vector<2x8x1xf32>
    %113 = vector.broadcast %112 : vector<2x8x1xf32> to vector<2x8x8xf32>
    %114 = arith.subf %110, %113 : vector<2x8x8xf32>
    %115 = math.exp %114 : vector<2x8x8xf32>
    %cst_33 = arith.constant dense<0.000000e+00> : vector<2x8xf32>
    %116 = vector.multi_reduction <add>, %115, %cst_33 [2] : vector<2x8x8xf32> to vector<2x8xf32>
    %117 = vector.shape_cast %116 : vector<2x8xf32> to vector<2x8x1xf32>
    %118 = tpu.reciprocal %117 {approx = true} : vector<2x8x1xf32> -> vector<2x8x1xf32>
    %119 = arith.mulf %117, %118 : vector<2x8x1xf32>
    %cst_34 = arith.constant 2.000000e+00 : f32
    %120 = vector.broadcast %cst_34 : f32 to vector<2x8x1xf32>
    %121 = arith.subf %120, %119 : vector<2x8x1xf32>
    %122 = arith.mulf %118, %121 : vector<2x8x1xf32>
    %123 = vector.broadcast %122 : vector<2x8x1xf32> to vector<2x8x8xf32>
    %124 = arith.mulf %115, %123 : vector<2x8x8xf32>
    "tpu.trace_start"() <{level = 10 : i32, message = "bqk,bkd->bqd"}> : () -> ()
    %cst_35 = arith.constant dense<0.000000e+00> : vector<2x8x8xf32>
    %125 = tpu.matmul %124, %107, %cst_35 {dimension_numbers = #tpu.dot_dimension_numbers<[2], [1], [1], [2], [0, 0, 0, 1, 1, 2], [0], [0]>} : vector<2x8x8xf32>, vector<2x8x8xf32>, vector<2x8x8xf32> -> vector<2x8x8xf32>
    "tpu.trace_stop"() : () -> ()
    %126 = vector.shape_cast %125 : vector<2x8x8xf32> to vector<16x8xf32>
    %127 = tpu.concatenate %51, %76, %101, %126 in 1 : vector<16x8xf32>, vector<16x8xf32>, vector<16x8xf32>, vector<16x8xf32> -> vector<16x32xf32>
    %c0_36 = arith.constant 0 : index
    %c0_37 = arith.constant 0 : index
    %128 = vector.load %arg3[%c0_36, %c0_37] : memref<32x32xf32, #tpu.memory_space<vmem>>, vector<32x32xf32>
    %cst_38 = arith.constant dense<0.000000e+00> : vector<16x32xf32>
    %129 = tpu.matmul %127, %128, %cst_38 {dimension_numbers = #tpu.dot_dimension_numbers<[1], [0], [0], [1], [0, 0, 1, 1], [], []>} : vector<16x32xf32>, vector<32x32xf32>, vector<16x32xf32> -> vector<16x32xf32>
    %c0_39 = arith.constant 0 : index
    %c0_40 = arith.constant 0 : index
    %130 = vector.load %arg4[%c0_39, %c0_40] : memref<1x32xf32, #tpu.memory_space<vmem>>, vector<1x32xf32>
    %131 = vector.broadcast %130 : vector<1x32xf32> to vector<16x32xf32>
    %132 = arith.addf %129, %131 : vector<16x32xf32>
    %133 = arith.addf %24, %132 : vector<16x32xf32>
    %c0_41 = arith.constant 0 : index
    %c0_42 = arith.constant 0 : index
    %134 = vector.load %arg11[%c0_41, %c0_42] : memref<1x32xf32, #tpu.memory_space<vmem>>, vector<1x32xf32>
    %c0_43 = arith.constant 0 : index
    %c0_44 = arith.constant 0 : index
    %135 = vector.load %arg12[%c0_43, %c0_44] : memref<1x32xf32, #tpu.memory_space<vmem>>, vector<1x32xf32>
    %cst_45 = arith.constant dense<0.000000e+00> : vector<16xf32>
    %136 = vector.multi_reduction <add>, %133, %cst_45 [1] : vector<16x32xf32> to vector<16xf32>
    %137 = vector.shape_cast %136 : vector<16xf32> to vector<16x1xf32>
    %cst_46 = arith.constant 3.200000e+01 : f32
    %138 = vector.broadcast %cst_46 : f32 to vector<16x1xf32>
    %139 = arith.divf %137, %138 : vector<16x1xf32>
    %140 = vector.broadcast %139 : vector<16x1xf32> to vector<16x32xf32>
    %141 = arith.subf %133, %140 : vector<16x32xf32>
    %142 = arith.mulf %141, %141 : vector<16x32xf32>
    %cst_47 = arith.constant dense<0.000000e+00> : vector<16xf32>
    %143 = vector.multi_reduction <add>, %142, %cst_47 [1] : vector<16x32xf32> to vector<16xf32>
    %144 = vector.shape_cast %143 : vector<16xf32> to vector<16x1xf32>
    %cst_48 = arith.constant 3.200000e+01 : f32
    %145 = vector.broadcast %cst_48 : f32 to vector<16x1xf32>
    %146 = arith.divf %144, %145 : vector<16x1xf32>
    %147 = vector.broadcast %139 : vector<16x1xf32> to vector<16x32xf32>
    %148 = arith.subf %133, %147 : vector<16x32xf32>
    %cst_49 = arith.constant 9.99999974E-6 : f32
    %149 = vector.broadcast %cst_49 : f32 to vector<16x1xf32>
    %150 = arith.addf %146, %149 : vector<16x1xf32>
    %151 = math.rsqrt %150 : vector<16x1xf32>
    %152 = vector.broadcast %151 : vector<16x1xf32> to vector<16x32xf32>
    %153 = arith.mulf %148, %152 : vector<16x32xf32>
    %154 = vector.broadcast %134 : vector<1x32xf32> to vector<16x32xf32>
    %155 = arith.mulf %153, %154 : vector<16x32xf32>
    %156 = vector.broadcast %135 : vector<1x32xf32> to vector<16x32xf32>
    %157 = arith.addf %155, %156 : vector<16x32xf32>
    %c0_50 = arith.constant 0 : index
    %c0_51 = arith.constant 0 : index
    %158 = vector.load %arg5[%c0_50, %c0_51] : memref<32x128xf32, #tpu.memory_space<vmem>>, vector<32x128xf32>
    %cst_52 = arith.constant dense<0.000000e+00> : vector<16x128xf32>
    %159 = tpu.matmul %157, %158, %cst_52 {dimension_numbers = #tpu.dot_dimension_numbers<[1], [0], [0], [1], [0, 0, 1, 1], [], []>} : vector<16x32xf32>, vector<32x128xf32>, vector<16x128xf32> -> vector<16x128xf32>
    %c0_53 = arith.constant 0 : index
    %c0_54 = arith.constant 0 : index
    %160 = vector.load %arg6[%c0_53, %c0_54] : memref<1x128xf32, #tpu.memory_space<vmem>>, vector<1x128xf32>
    %161 = vector.broadcast %160 : vector<1x128xf32> to vector<16x128xf32>
    %162 = arith.addf %159, %161 : vector<16x128xf32>
    %cst_55 = arith.constant 5.000000e-01 : f32
    %163 = vector.broadcast %cst_55 : f32 to vector<16x128xf32>
    %164 = arith.mulf %163, %162 : vector<16x128xf32>
    %cst_56 = arith.constant 0.707106769 : f32
    %165 = vector.broadcast %cst_56 : f32 to vector<16x128xf32>
    %166 = arith.mulf %162, %165 : vector<16x128xf32>
    %cst_57 = arith.constant 0.000000e+00 : f32
    %167 = vector.broadcast %cst_57 : f32 to vector<16x128xf32>
    %168 = arith.cmpf oge, %166, %167 : vector<16x128xf32>
    %cst_58 = arith.constant 1.000000e+00 : f32
    %cst_59 = arith.constant -1.000000e+00 : f32
    %169 = vector.broadcast %cst_58 : f32 to vector<16x128xf32>
    %170 = vector.broadcast %cst_59 : f32 to vector<16x128xf32>
    %171 = arith.select %168, %169, %170 : vector<16x128xi1>, vector<16x128xf32>
    %172 = math.absf %166 : vector<16x128xf32>
    %cst_60 = arith.constant 0.327591091 : f32
    %173 = vector.broadcast %cst_60 : f32 to vector<16x128xf32>
    %174 = arith.mulf %173, %172 : vector<16x128xf32>
    %cst_61 = arith.constant 1.000000e+00 : f32
    %175 = vector.broadcast %cst_61 : f32 to vector<16x128xf32>
    %176 = arith.addf %175, %174 : vector<16x128xf32>
    %177 = tpu.reciprocal %176 {approx = true} : vector<16x128xf32> -> vector<16x128xf32>
    %178 = arith.mulf %176, %177 : vector<16x128xf32>
    %cst_62 = arith.constant 2.000000e+00 : f32
    %179 = vector.broadcast %cst_62 : f32 to vector<16x128xf32>
    %180 = arith.subf %179, %178 : vector<16x128xf32>
    %181 = arith.mulf %177, %180 : vector<16x128xf32>
    %cst_63 = arith.constant 1.06140542 : f32
    %182 = vector.broadcast %cst_63 : f32 to vector<16x128xf32>
    %183 = arith.mulf %182, %181 : vector<16x128xf32>
    %cst_64 = arith.constant -1.45315206 : f32
    %184 = vector.broadcast %cst_64 : f32 to vector<16x128xf32>
    %185 = arith.addf %183, %184 : vector<16x128xf32>
    %186 = arith.mulf %185, %181 : vector<16x128xf32>
    %cst_65 = arith.constant 1.42141378 : f32
    %187 = vector.broadcast %cst_65 : f32 to vector<16x128xf32>
    %188 = arith.addf %186, %187 : vector<16x128xf32>
    %189 = arith.mulf %188, %181 : vector<16x128xf32>
    %cst_66 = arith.constant -0.284496725 : f32
    %190 = vector.broadcast %cst_66 : f32 to vector<16x128xf32>
    %191 = arith.addf %189, %190 : vector<16x128xf32>
    %192 = arith.mulf %191, %181 : vector<16x128xf32>
    %cst_67 = arith.constant 0.254829586 : f32
    %193 = vector.broadcast %cst_67 : f32 to vector<16x128xf32>
    %194 = arith.addf %192, %193 : vector<16x128xf32>
    %195 = arith.mulf %194, %181 : vector<16x128xf32>
    %cst_68 = arith.constant 0.000000e+00 : f32
    %196 = vector.broadcast %cst_68 : f32 to vector<16x128xf32>
    %197 = arith.subf %196, %172 : vector<16x128xf32>
    %198 = arith.mulf %197, %172 : vector<16x128xf32>
    %199 = math.exp %198 : vector<16x128xf32>
    %200 = arith.mulf %195, %199 : vector<16x128xf32>
    %cst_69 = arith.constant 1.000000e+00 : f32
    %201 = vector.broadcast %cst_69 : f32 to vector<16x128xf32>
    %202 = arith.subf %201, %200 : vector<16x128xf32>
    %203 = arith.mulf %171, %202 : vector<16x128xf32>
    %cst_70 = arith.constant 1.000000e+00 : f32
    %204 = vector.broadcast %cst_70 : f32 to vector<16x128xf32>
    %205 = arith.addf %204, %203 : vector<16x128xf32>
    %206 = arith.mulf %164, %205 : vector<16x128xf32>
    %c0_71 = arith.constant 0 : index
    %c0_72 = arith.constant 0 : index
    %207 = vector.load %arg7[%c0_71, %c0_72] : memref<128x32xf32, #tpu.memory_space<vmem>>, vector<128x32xf32>
    %cst_73 = arith.constant dense<0.000000e+00> : vector<16x32xf32>
    %208 = tpu.matmul %206, %207, %cst_73 {dimension_numbers = #tpu.dot_dimension_numbers<[1], [0], [0], [1], [0, 0, 1, 1], [], []>} : vector<16x128xf32>, vector<128x32xf32>, vector<16x32xf32> -> vector<16x32xf32>
    %c0_74 = arith.constant 0 : index
    %c0_75 = arith.constant 0 : index
    %209 = vector.load %arg8[%c0_74, %c0_75] : memref<1x32xf32, #tpu.memory_space<vmem>>, vector<1x32xf32>
    %210 = vector.broadcast %209 : vector<1x32xf32> to vector<16x32xf32>
    %211 = arith.addf %208, %210 : vector<16x32xf32>
    %212 = arith.addf %157, %211 : vector<16x32xf32>
    %c0_76 = arith.constant 0 : index
    %c0_77 = arith.constant 0 : index
    %213 = vector.load %arg13[%c0_76, %c0_77] : memref<16x32xf32, #tpu.memory_space<vmem>>, vector<16x32xf32>
    tpu.vector_store %arg13[%c0_76, %c0_77], %212 {strides = array<i32>} : memref<16x32xf32, #tpu.memory_space<vmem>>, vector<16x32xf32>,
    return
  }
  func.func @transform_0(%arg0: i32) -> (i32, i32) {
    %c0_i32 = arith.constant 0 : i32
    %c0_i32_0 = arith.constant 0 : i32
    return %arg0, %c0_i32 : i32, i32
  }
  func.func @transform_1(%arg0: i32) -> (i32, i32) {
    %c0_i32 = arith.constant 0 : i32
    %c0_i32_0 = arith.constant 0 : i32
    %c0_i32_1 = arith.constant 0 : i32
    return %c0_i32, %c0_i32_0 : i32, i32
  }
  func.func @transform_2(%arg0: i32) -> (i32, i32) {
    %c0_i32 = arith.constant 0 : i32
    %c0_i32_0 = arith.constant 0 : i32
    %c0_i32_1 = arith.constant 0 : i32
    return %c0_i32, %c0_i32_0 : i32, i32
  }
  func.func @transform_3(%arg0: i32) -> (i32, i32) {
    %c0_i32 = arith.constant 0 : i32
    %c0_i32_0 = arith.constant 0 : i32
    %c0_i32_1 = arith.constant 0 : i32
    return %c0_i32, %c0_i32_0 : i32, i32
  }
  func.func @transform_4(%arg0: i32) -> (i32, i32) {
    %c0_i32 = arith.constant 0 : i32
    %c0_i32_0 = arith.constant 0 : i32
    %c0_i32_1 = arith.constant 0 : i32
    return %c0_i32, %c0_i32_0 : i32, i32
  }
  func.func @transform_5(%arg0: i32) -> (i32, i32) {
    %c0_i32 = arith.constant 0 : i32
    %c0_i32_0 = arith.constant 0 : i32
    %c0_i32_1 = arith.constant 0 : i32
    return %c0_i32, %c0_i32_0 : i32, i32
  }
  func.func @transform_6(%arg0: i32) -> (i32, i32) {
    %c0_i32 = arith.constant 0 : i32
    %c0_i32_0 = arith.constant 0 : i32
    %c0_i32_1 = arith.constant 0 : i32
    return %c0_i32, %c0_i32_0 : i32, i32
  }
  func.func @transform_7(%arg0: i32) -> (i32, i32) {
    %c0_i32 = arith.constant 0 : i32
    %c0_i32_0 = arith.constant 0 : i32
    %c0_i32_1 = arith.constant 0 : i32
    return %c0_i32, %c0_i32_0 : i32, i32
  }
  func.func @transform_8(%arg0: i32) -> (i32, i32) {
    %c0_i32 = arith.constant 0 : i32
    %c0_i32_0 = arith.constant 0 : i32
    %c0_i32_1 = arith.constant 0 : i32
    return %c0_i32, %c0_i32_0 : i32, i32
  }
  func.func @transform_9(%arg0: i32) -> (i32, i32) {
    %c0_i32 = arith.constant 0 : i32
    %c0_i32_0 = arith.constant 0 : i32
    %c0_i32_1 = arith.constant 0 : i32
    return %c0_i32, %c0_i32_0 : i32, i32
  }
  func.func @transform_10(%arg0: i32) -> (i32, i32) {
    %c0_i32 = arith.constant 0 : i32
    %c0_i32_0 = arith.constant 0 : i32
    %c0_i32_1 = arith.constant 0 : i32
    return %c0_i32, %c0_i32_0 : i32, i32
  }
  func.func @transform_11(%arg0: i32) -> (i32, i32) {
    %c0_i32 = arith.constant 0 : i32
    %c0_i32_0 = arith.constant 0 : i32
    %c0_i32_1 = arith.constant 0 : i32
    return %c0_i32, %c0_i32_0 : i32, i32
  }
  func.func @transform_12(%arg0: i32) -> (i32, i32) {
    %c0_i32 = arith.constant 0 : i32
    %c0_i32_0 = arith.constant 0 : i32
    return %arg0, %c0_i32 : i32, i32
  }
}

</mosaic_0001>

<llo_original>
// kernel: tpu_custom_call.1
$region0: #{tpu_custom_call.1}
  #allocation0 [shape = 'u32[]', space=smem, size = 0x4, offset = 0x4, fixed_abs, tag = 'smem constant byte address 0x4 - core index']
  #allocation1 [shape = 'u32[72,128]{1,0:T(1,128)}', space=vmem, size = 0x9000, scoped, tag = 'internal scratch']
  %s0 = inlined_call_operand.vmem [shape: f32[16,32], index: 0, kind: input, shape index: {}]
  %s1 = inlined_call_operand.vmem [shape: f32[32,96], index: 1, kind: input, shape index: {}]
  %s2 = inlined_call_operand.vmem [shape: f32[32,32], index: 2, kind: input, shape index: {}]
  %s3 = inlined_call_operand.vmem [shape: f32[1,32], index: 3, kind: input, shape index: {}]
  %s4 = inlined_call_operand.vmem [shape: f32[32,128], index: 4, kind: input, shape index: {}]
  %s5 = inlined_call_operand.vmem [shape: f32[1,128], index: 5, kind: input, shape index: {}]
  %s6 = inlined_call_operand.vmem [shape: f32[128,32], index: 6, kind: input, shape index: {}]
  %s7 = inlined_call_operand.vmem [shape: f32[1,32], index: 7, kind: input, shape index: {}]
  %s8 = inlined_call_operand.vmem [shape: f32[1,32], index: 8, kind: input, shape index: {}]
  %s9 = inlined_call_operand.vmem [shape: f32[1,32], index: 9, kind: input, shape index: {}]
  %s10 = inlined_call_operand.vmem [shape: f32[1,32], index: 10, kind: input, shape index: {}]
  %s11 = inlined_call_operand.vmem [shape: f32[1,32], index: 11, kind: input, shape index: {}]
  %s12 = inlined_call_operand.hbm [shape: f32[16,32], index: 12, kind: output, shape index: {}]
  %s13 = sld [smem:[#allocation0]]
  $region58: #{tpu_custom_call.1} parent=0
    _
  %s15 = ssub.s32 1, %s13
  %s16 = scalar_select 0, %s15, %s13
  $region1: #{tpu_custom_call.1} parent=0
    #allocation2 [shape = 'u8[8192]{0}', space=vmem, size = 0x2000, scoped, tag = 'output window, operand 0, single buffered']
    #allocation3 [shape = 's32[1]{0}', space=sflag, size = 0x4, scoped, tag = 'scoped memory for tpu_custom_call.1']
    %17 = vsyncpa [#allocation3], 0
    // Predicated region
    $region2: #{tpu_custom_call.1} parent=1 // pred_check
      _
    $region3: #{tpu_custom_call.1} parent=1 // pred_check_branch
      %19 = sbr.rel (0) target = $region5
    $region4: #{tpu_custom_call.1} parent=1 // pred_region
      _
    $region5: #{tpu_custom_call.1} parent=1 // pred_fallthru
      _
    // Predicated region
    $region6: #{tpu_custom_call.1} parent=1 // pred_check
      _
    $region7: #{tpu_custom_call.1} parent=1 // pred_check_branch
      %21 = sbr.rel (0) target = $region9
    $region8: #{tpu_custom_call.1} parent=1 // pred_region
      _
    $region9: #{tpu_custom_call.1} parent=1 // pred_fallthru
      _
    // Predicated region
    $region10: #{tpu_custom_call.1} parent=1 // pred_check
      _
    $region11: #{tpu_custom_call.1} parent=1 // pred_check_branch
      %23 = sbr.rel (0) target = $region13
    $region12: #{tpu_custom_call.1} parent=1 // pred_region
      _
    $region13: #{tpu_custom_call.1} parent=1 // pred_fallthru
      _
    // Predicated region
    $region14: #{tpu_custom_call.1} parent=1 // pred_check
      _
    $region15: #{tpu_custom_call.1} parent=1 // pred_check_branch
      %25 = sbr.rel (0) target = $region17
    $region16: #{tpu_custom_call.1} parent=1 // pred_region
      _
    $region17: #{tpu_custom_call.1} parent=1 // pred_fallthru
      _
    // Predicated region
    $region18: #{tpu_custom_call.1} parent=1 // pred_check
      _
    $region19: #{tpu_custom_call.1} parent=1 // pred_check_branch
      %27 = sbr.rel (0) target = $region21
    $region20: #{tpu_custom_call.1} parent=1 // pred_region
      _
    $region21: #{tpu_custom_call.1} parent=1 // pred_fallthru
      _
    // Predicated region
    $region22: #{tpu_custom_call.1} parent=1 // pred_check
      _
    $region23: #{tpu_custom_call.1} parent=1 // pred_check_branch
      %29 = sbr.rel (0) target = $region25
    $region24: #{tpu_custom_call.1} parent=1 // pred_region
      _
    $region25: #{tpu_custom_call.1} parent=1 // pred_fallthru
      _
    // Predicated region
    $region26: #{tpu_custom_call.1} parent=1 // pred_check
      _
    $region27: #{tpu_custom_call.1} parent=1 // pred_check_branch
      %31 = sbr.rel (0) target = $region29
    $region28: #{tpu_custom_call.1} parent=1 // pred_region
      _
    $region29: #{tpu_custom_call.1} parent=1 // pred_fallthru
      _
    // Predicated region
    $region30: #{tpu_custom_call.1} parent=1 // pred_check
      _
    $region31: #{tpu_custom_call.1} parent=1 // pred_check_branch
      %33 = sbr.rel (0) target = $region33
    $region32: #{tpu_custom_call.1} parent=1 // pred_region
      _
    $region33: #{tpu_custom_call.1} parent=1 // pred_fallthru
      _
    // Predicated region
    $region34: #{tpu_custom_call.1} parent=1 // pred_check
      _
    $region35: #{tpu_custom_call.1} parent=1 // pred_check_branch
      %35 = sbr.rel (0) target = $region37
    $region36: #{tpu_custom_call.1} parent=1 // pred_region
      _
    $region37: #{tpu_custom_call.1} parent=1 // pred_fallthru
      _
    // Predicated region
    $region38: #{tpu_custom_call.1} parent=1 // pred_check
      _
    $region39: #{tpu_custom_call.1} parent=1 // pred_check_branch
      %37 = sbr.rel (0) target = $region41
    $region40: #{tpu_custom_call.1} parent=1 // pred_region
      _
    $region41: #{tpu_custom_call.1} parent=1 // pred_fallthru
      _
    // Predicated region
    $region42: #{tpu_custom_call.1} parent=1 // pred_check
      _
    $region43: #{tpu_custom_call.1} parent=1 // pred_check_branch
      %39 = sbr.rel (0) target = $region45
    $region44: #{tpu_custom_call.1} parent=1 // pred_region
      _
    $region45: #{tpu_custom_call.1} parent=1 // pred_fallthru
      _
    // Predicated region
    $region46: #{tpu_custom_call.1} parent=1 // pred_check
      _
    $region47: #{tpu_custom_call.1} parent=1 // pred_check_branch
      %41 = sbr.rel (0) target = $region49
    $region48: #{tpu_custom_call.1} parent=1 // pred_region
      _
    $region49: #{tpu_custom_call.1} parent=1 // pred_fallthru
      _
    %v42 = vld [vmem:[%s0] sm:$0xff]
    %v43 = vld [vmem:[%s0 + $0x8] sm:$0xff]
    %v44 = vld [vmem:[%s8] sm:$0x1]
    %v45 = vld [vmem:[%s9] sm:$0x1]
    %vm46 = vcmask 261120
    %v47 = vsel %vm46, %v42, 0.0
    %48 = vadd.xlane.f32.xlu0 %v47
    %v49 = vpop.xlane.xlu0 %48
    %v50 = vsel %vm46, %v43, 0.0
    %51 = vadd.xlane.f32.xlu0 %v50
    %v52 = vpop.xlane.xlu0 %51
    %v53 = vrcp.pop 32.0
    %v54 = vmul.f32 32.0, %v53
    %v55 = vsub.f32 1.0, %v54
    %v56 = vmul.f32 %v53, %v55
    %v57 = vadd.f32 %v53, %v56
    %vm58 = vweird.f32 %v53
    %v59 = vsel %vm58, %v53, %v57
    %v60 = vmul.f32 %v49, %v59
    %v61 = vmul.f32 %v52, %v59
    %v62 = vsub.f32 %v42, %v60
    %v63 = vsub.f32 %v43, %v61
    %v64 = vmul.f32 %v62, %v62
    %v65 = vmul.f32 %v63, %v63
    %v66 = vsel %vm46, %v64, 0.0
    %67 = vadd.xlane.f32.xlu0 %v66
    %v68 = vpop.xlane.xlu0 %67
    %v69 = vsel %vm46, %v65, 0.0
    %70 = vadd.xlane.f32.xlu0 %v69
    %v71 = vpop.xlane.xlu0 %70
    %v72 = vmul.f32 %v68, %v59
    %v73 = vmul.f32 %v71, %v59
    %v74 = vadd.f32 %v72, 1e-05
    %v75 = vadd.f32 %v73, 1e-05
    %v76 = vrsqrt.pop %v74
    %v77 = vmul.f32 %v76, %v74
    %v78 = vmul.f32 %v77, %v76
    %v79 = vmul.f32 0.5, %v78
    %v80 = vsub.f32 1.5, %v79
    %v81 = vmul.f32 %v76, %v80
    %vm82 = vweird.f32 %v74
    %vm83 = vweird.f32 %v76
    %vm84 = vmor %vm82, %vm83
    %v85 = vsel %vm84, %v76, %v81
    %v86 = vrsqrt.pop %v75
    %v87 = vmul.f32 %v86, %v75
    %v88 = vmul.f32 %v87, %v86
    %v89 = vmul.f32 0.5, %v88
    %v90 = vsub.f32 1.5, %v89
    %v91 = vmul.f32 %v86, %v90
    %vm92 = vweird.f32 %v75
    %vm93 = vweird.f32 %v86
    %vm94 = vmor %vm92, %vm93
    %v95 = vsel %vm94, %v86, %v91
    %v96 = vmul.f32 %v62, %v85
    %v97 = vmul.f32 %v63, %v95
    %v99 = vperm.slane %v44, 0
    %v101 = vmul.f32 %v96, %v99
    %v102 = vmul.f32 %v97, %v99
    %v104 = vperm.slane %v45, 0
    %v106 = vadd.f32 %v101, %v104
    %v107 = vadd.f32 %v102, %v104
    %v108 = vld [vmem:[%s1] sm:$0xff]
    %v109 = vld [vmem:[%s1 + $0x8] sm:$0xff]
    %v110 = vld [vmem:[%s1 + $0x10] sm:$0xff]
    %v111 = vld [vmem:[%s1 + $0x18] sm:$0xff]
    %v113 = vsel %vm46, %v106, 0
    %v116 = vsel %vm46, %v107, 0
    %118 = vmatpush.msra.mxu0 0.0
    %119 = vmatpush.msra.mxu0 0.0
    %120 = vmatpush.msra.mxu0 0.0
    %121 = vmatpush.msra.mxu0 0.0
    %122 = vmatpush.msra.mxu0 0.0
    %123 = vmatpush.msra.mxu0 0.0
    %124 = vmatpush.msra.mxu0 0.0
    %125 = vmatpush.msra.mxu0 0.0
    %126 = vmatpush.msra.mxu0 0.0
    %127 = vmatpush.msra.mxu0 0.0
    %128 = vmatpush.msra.mxu0 0.0
    %129 = vmatpush.msra.mxu0 0.0
    %130 = vmatpush.msra.mxu0 %v111
    %131 = vmatpush.msra.mxu0 %v110
    %132 = vmatpush.msra.mxu0 %v109
    %133 = vmatpush.msra.mxu0 %v108
    %134 = vmatmul.f32.gmra.mxu0 %v113
    %v135 = vpop.f32.mrf.mxu0
    %v136 = vadd.f32 0.0, %v135
    %137 = vmatmul.f32.gmra.mxu0 %v116
    %v138 = vpop.f32.mrf.mxu0
    %v139 = vadd.f32 0.0, %v138
    %140 = vdwg.mxu0
    %142 = vrot.lane.b32.xlu0 %v136, 96
    %v143 = vpop.permute.xlu0 %142
    %vm144 = vcmask 64512
    %v145 = vsel %vm144, %v136, 0
    %v147 = vsel %vm144, %v143, 0
    %149 = vmatpush.xpose.msra.mxu0 0.0
    %150 = vmatpush.xpose.msra.mxu0 0.0
    %151 = vmatpush.xpose.msra.mxu0 0.0
    %152 = vmatpush.xpose.msra.mxu0 0.0
    %153 = vmatpush.xpose.msra.mxu0 0.0
    %154 = vmatpush.xpose.msra.mxu0 0.0
    %155 = vmatpush.xpose.msra.mxu0 0.0
    %156 = vmatpush.xpose.msra.mxu0 0.0
    %157 = vmatpush.xpose.msra.mxu0 0.0
    %158 = vmatpush.xpose.msra.mxu0 0.0
    %159 = vmatpush.xpose.msra.mxu0 0.0
    %160 = vmatpush.xpose.msra.mxu0 0.0
    %161 = vmatpush.xpose.msra.mxu0 0.0
    %162 = vmatpush.xpose.msra.mxu0 0.0
    %163 = vmatpush.xpose.msra.mxu0 0.0
    %164 = vmatpush.xpose.msra.mxu0 %v147
    %165 = vmatmul.f32.gmra.mxu0 %v145
    %v166 = vpop.f32.mrf.mxu0
    %v167 = vadd.f32 0.0, %v166
    %168 = vdwg.mxu0
    %170 = vrot.lane.b32.xlu0 %v139, 96
    %v171 = vpop.permute.xlu0 %170
    %v172 = vsel %vm144, %v139, 0
    %v174 = vsel %vm144, %v171, 0
    %176 = vmatpush.xpose.msra.mxu0 0.0
    %177 = vmatpush.xpose.msra.mxu0 0.0
    %178 = vmatpush.xpose.msra.mxu0 0.0
    %179 = vmatpush.xpose.msra.mxu0 0.0
    %180 = vmatpush.xpose.msra.mxu0 0.0
    %181 = vmatpush.xpose.msra.mxu0 0.0
    %182 = vmatpush.xpose.msra.mxu0 0.0
    %183 = vmatpush.xpose.msra.mxu0 0.0
    %184 = vmatpush.xpose.msra.mxu0 0.0
    %185 = vmatpush.xpose.msra.mxu0 0.0
    %186 = vmatpush.xpose.msra.mxu0 0.0
    %187 = vmatpush.xpose.msra.mxu0 0.0
    %188 = vmatpush.xpose.msra.mxu0 0.0
    %189 = vmatpush.xpose.msra.mxu0 0.0
    %190 = vmatpush.xpose.msra.mxu0 0.0
    %191 = vmatpush.xpose.msra.mxu0 %v174
    %192 = vmatmul.f32.gmra.mxu0 %v172
    %v193 = vpop.f32.mrf.mxu0
    %v194 = vadd.f32 0.0, %v193
    %195 = vdwg.mxu0
    %v196 = vmul.f32 %v167, 0.17677669
    %v197 = vmul.f32 %v194, 0.17677669
    %v198 = vsel %vm144, %v196, -inf
    %199 = vmax.xlane.f32.xlu0 %v198
    %v200 = vpop.xlane.xlu0 %199
    %v201 = vsel %vm144, %v197, -inf
    %202 = vmax.xlane.f32.xlu0 %v201
    %v203 = vpop.xlane.xlu0 %202
    %v204 = vsub.f32 %v196, %v200
    %v205 = vsub.f32 %v197, %v203
    %v206 = vmul.f32 %v204, 1.442695
    %v207 = vpow.pop %v206
    %v208 = vmul.f32 %v205, 1.442695
    %v209 = vpow.pop %v208
    %v210 = vsel %vm144, %v207, 0.0
    %211 = vadd.xlane.f32.xlu0 %v210
    %v212 = vpop.xlane.xlu0 %211
    %v213 = vsel %vm144, %v209, 0.0
    %214 = vadd.xlane.f32.xlu0 %v213
    %v215 = vpop.xlane.xlu0 %214
    %v216 = vrcp.pop %v212
    %v217 = vrcp.pop %v215
    %v218 = vmul.f32 %v212, %v216
    %v219 = vmul.f32 %v215, %v217
    %v220 = vsub.f32 2.0, %v218
    %v221 = vsub.f32 2.0, %v219
    %v222 = vmul.f32 %v216, %v220
    %v223 = vmul.f32 %v217, %v221
    %v224 = vmul.f32 %v207, %v222
    %v225 = vmul.f32 %v209, %v223
    %226 = vrot.lane.b32.xlu0 %v136, 64
    %v227 = vpop.permute.xlu0 %226
    %v230 = vsel %vm144, %v224, 0
    %232 = vmatpush.msra.mxu0 0.0
    %233 = vmatpush.msra.mxu0 0.0
    %234 = vmatpush.msra.mxu0 0.0
    %235 = vmatpush.msra.mxu0 0.0
    %236 = vmatpush.msra.mxu0 0.0
    %237 = vmatpush.msra.mxu0 0.0
    %238 = vmatpush.msra.mxu0 0.0
    %239 = vmatpush.msra.mxu0 0.0
    %240 = vmatpush.msra.mxu0 0.0
    %241 = vmatpush.msra.mxu0 0.0
    %242 = vmatpush.msra.mxu0 0.0
    %243 = vmatpush.msra.mxu0 0.0
    %244 = vmatpush.msra.mxu0 0.0
    %245 = vmatpush.msra.mxu0 0.0
    %246 = vmatpush.msra.mxu0 0.0
    %247 = vmatpush.msra.mxu0 %v227
    %248 = vmatmul.f32.gmra.mxu0 %v230
    %v249 = vpop.f32.mrf.mxu0
    %v250 = vadd.f32 0.0, %v249
    %251 = vdwg.mxu0
    %252 = vrot.lane.b32.xlu0 %v139, 64
    %v253 = vpop.permute.xlu0 %252
    %v256 = vsel %vm144, %v225, 0
    %258 = vmatpush.msra.mxu0 0.0
    %259 = vmatpush.msra.mxu0 0.0
    %260 = vmatpush.msra.mxu0 0.0
    %261 = vmatpush.msra.mxu0 0.0
    %262 = vmatpush.msra.mxu0 0.0
    %263 = vmatpush.msra.mxu0 0.0
    %264 = vmatpush.msra.mxu0 0.0
    %265 = vmatpush.msra.mxu0 0.0
    %266 = vmatpush.msra.mxu0 0.0
    %267 = vmatpush.msra.mxu0 0.0
    %268 = vmatpush.msra.mxu0 0.0
    %269 = vmatpush.msra.mxu0 0.0
    %270 = vmatpush.msra.mxu0 0.0
    %271 = vmatpush.msra.mxu0 0.0
    %272 = vmatpush.msra.mxu0 0.0
    %273 = vmatpush.msra.mxu0 %v253
    %274 = vmatmul.f32.gmra.mxu0 %v256
    %v275 = vpop.f32.mrf.mxu0
    %v276 = vadd.f32 0.0, %v275
    %277 = vdwg.mxu0
    %278 = vrot.lane.b32.xlu0 %v136, 120
    %v279 = vpop.permute.xlu0 %278
    %280 = vrot.lane.b32.xlu0 %v136, 88
    %v281 = vpop.permute.xlu0 %280
    %v282 = vsel %vm144, %v279, 0
    %v284 = vsel %vm144, %v281, 0
    %286 = vmatpush.xpose.msra.mxu0 0.0
    %287 = vmatpush.xpose.msra.mxu0 0.0
    %288 = vmatpush.xpose.msra.mxu0 0.0
    %289 = vmatpush.xpose.msra.mxu0 0.0
    %290 = vmatpush.xpose.msra.mxu0 0.0
    %291 = vmatpush.xpose.msra.mxu0 0.0
    %292 = vmatpush.xpose.msra.mxu0 0.0
    %293 = vmatpush.xpose.msra.mxu0 0.0
    %294 = vmatpush.xpose.msra.mxu0 0.0
    %295 = vmatpush.xpose.msra.mxu0 0.0
    %296 = vmatpush.xpose.msra.mxu0 0.0
    %297 = vmatpush.xpose.msra.mxu0 0.0
    %298 = vmatpush.xpose.msra.mxu0 0.0
    %299 = vmatpush.xpose.msra.mxu0 0.0
    %300 = vmatpush.xpose.msra.mxu0 0.0
    %301 = vmatpush.xpose.msra.mxu0 %v284
    %302 = vmatmul.f32.gmra.mxu0 %v282
    %v303 = vpop.f32.mrf.mxu0
    %v304 = vadd.f32 0.0, %v303
    %305 = vdwg.mxu0
    %306 = vrot.lane.b32.xlu0 %v139, 120
    %v307 = vpop.permute.xlu0 %306
    %308 = vrot.lane.b32.xlu0 %v139, 88
    %v309 = vpop.permute.xlu0 %308
    %v310 = vsel %vm144, %v307, 0
    %v312 = vsel %vm144, %v309, 0
    %314 = vmatpush.xpose.msra.mxu0 0.0
    %315 = vmatpush.xpose.msra.mxu0 0.0
    %316 = vmatpush.xpose.msra.mxu0 0.0
    %317 = vmatpush.xpose.msra.mxu0 0.0
    %318 = vmatpush.xpose.msra.mxu0 0.0
    %319 = vmatpush.xpose.msra.mxu0 0.0
    %320 = vmatpush.xpose.msra.mxu0 0.0
    %321 = vmatpush.xpose.msra.mxu0 0.0
    %322 = vmatpush.xpose.msra.mxu0 0.0
    %323 = vmatpush.xpose.msra.mxu0 0.0
    %324 = vmatpush.xpose.msra.mxu0 0.0
    %325 = vmatpush.xpose.msra.mxu0 0.0
    %326 = vmatpush.xpose.msra.mxu0 0.0
    %327 = vmatpush.xpose.msra.mxu0 0.0
    %328 = vmatpush.xpose.msra.mxu0 0.0
    %329 = vmatpush.xpose.msra.mxu0 %v312
    %330 = vmatmul.f32.gmra.mxu0 %v310
    %v331 = vpop.f32.mrf.mxu0
    %v332 = vadd.f32 0.0, %v331
    %333 = vdwg.mxu0
    %v334 = vmul.f32 %v304, 0.17677669
    %v335 = vmul.f32 %v332, 0.17677669
    %v336 = vsel %vm144, %v334, -inf
    %337 = vmax.xlane.f32.xlu0 %v336
    %v338 = vpop.xlane.xlu0 %337
    %v339 = vsel %vm144, %v335, -inf
    %340 = vmax.xlane.f32.xlu0 %v339
    %v341 = vpop.xlane.xlu0 %340
    %v342 = vsub.f32 %v334, %v338
    %v343 = vsub.f32 %v335, %v341
    %v344 = vmul.f32 %v342, 1.442695
    %v345 = vpow.pop %v344
    %v346 = vmul.f32 %v343, 1.442695
    %v347 = vpow.pop %v346
    %v348 = vsel %vm144, %v345, 0.0
    %349 = vadd.xlane.f32.xlu0 %v348
    %v350 = vpop.xlane.xlu0 %349
    %v351 = vsel %vm144, %v347, 0.0
    %352 = vadd.xlane.f32.xlu0 %v351
    %v353 = vpop.xlane.xlu0 %352
    %v354 = vrcp.pop %v350
    %v355 = vrcp.pop %v353
    %v356 = vmul.f32 %v350, %v354
    %v357 = vmul.f32 %v353, %v355
    %v358 = vsub.f32 2.0, %v356
    %v359 = vsub.f32 2.0, %v357
    %v360 = vmul.f32 %v354, %v358
    %v361 = vmul.f32 %v355, %v359
    %v362 = vmul.f32 %v345, %v360
    %v363 = vmul.f32 %v347, %v361
    %364 = vrot.lane.b32.xlu0 %v136, 56
    %v365 = vpop.permute.xlu0 %364
    %v368 = vsel %vm144, %v362, 0
    %370 = vmatpush.msra.mxu0 0.0
    %371 = vmatpush.msra.mxu0 0.0
    %372 = vmatpush.msra.mxu0 0.0
    %373 = vmatpush.msra.mxu0 0.0
    %374 = vmatpush.msra.mxu0 0.0
    %375 = vmatpush.msra.mxu0 0.0
    %376 = vmatpush.msra.mxu0 0.0
    %377 = vmatpush.msra.mxu0 0.0
    %378 = vmatpush.msra.mxu0 0.0
    %379 = vmatpush.msra.mxu0 0.0
    %380 = vmatpush.msra.mxu0 0.0
    %381 = vmatpush.msra.mxu0 0.0
    %382 = vmatpush.msra.mxu0 0.0
    %383 = vmatpush.msra.mxu0 0.0
    %384 = vmatpush.msra.mxu0 0.0
    %385 = vmatpush.msra.mxu0 %v365
    %386 = vmatmul.f32.gmra.mxu0 %v368
    %v387 = vpop.f32.mrf.mxu0
    %v388 = vadd.f32 0.0, %v387
    %389 = vdwg.mxu0
    %390 = vrot.lane.b32.xlu0 %v139, 56
    %v391 = vpop.permute.xlu0 %390
    %v394 = vsel %vm144, %v363, 0
    %396 = vmatpush.msra.mxu0 0.0
    %397 = vmatpush.msra.mxu0 0.0
    %398 = vmatpush.msra.mxu0 0.0
    %399 = vmatpush.msra.mxu0 0.0
    %400 = vmatpush.msra.mxu0 0.0
    %401 = vmatpush.msra.mxu0 0.0
    %402 = vmatpush.msra.mxu0 0.0
    %403 = vmatpush.msra.mxu0 0.0
    %404 = vmatpush.msra.mxu0 0.0
    %405 = vmatpush.msra.mxu0 0.0
    %406 = vmatpush.msra.mxu0 0.0
    %407 = vmatpush.msra.mxu0 0.0
    %408 = vmatpush.msra.mxu0 0.0
    %409 = vmatpush.msra.mxu0 0.0
    %410 = vmatpush.msra.mxu0 0.0
    %411 = vmatpush.msra.mxu0 %v391
    %412 = vmatmul.f32.gmra.mxu0 %v394
    %v413 = vpop.f32.mrf.mxu0
    %v414 = vadd.f32 0.0, %v413
    %415 = vdwg.mxu0
    %416 = vrot.lane.b32.xlu0 %v136, 112
    %v417 = vpop.permute.xlu0 %416
    %418 = vrot.lane.b32.xlu0 %v136, 80
    %v419 = vpop.permute.xlu0 %418
    %v420 = vsel %vm144, %v417, 0
    %v422 = vsel %vm144, %v419, 0
    %424 = vmatpush.xpose.msra.mxu0 0.0
    %425 = vmatpush.xpose.msra.mxu0 0.0
    %426 = vmatpush.xpose.msra.mxu0 0.0
    %427 = vmatpush.xpose.msra.mxu0 0.0
    %428 = vmatpush.xpose.msra.mxu0 0.0
    %429 = vmatpush.xpose.msra.mxu0 0.0
    %430 = vmatpush.xpose.msra.mxu0 0.0
    %431 = vmatpush.xpose.msra.mxu0 0.0
    %432 = vmatpush.xpose.msra.mxu0 0.0
    %433 = vmatpush.xpose.msra.mxu0 0.0
    %434 = vmatpush.xpose.msra.mxu0 0.0
    %435 = vmatpush.xpose.msra.mxu0 0.0
    %436 = vmatpush.xpose.msra.mxu0 0.0
    %437 = vmatpush.xpose.msra.mxu0 0.0
    %438 = vmatpush.xpose.msra.mxu0 0.0
    %439 = vmatpush.xpose.msra.mxu0 %v422
    %440 = vmatmul.f32.gmra.mxu0 %v420
    %v441 = vpop.f32.mrf.mxu0
    %v442 = vadd.f32 0.0, %v441
    %443 = vdwg.mxu0
    %444 = vrot.lane.b32.xlu0 %v139, 112
    %v445 = vpop.permute.xlu0 %444
    %446 = vrot.lane.b32.xlu0 %v139, 80
    %v447 = vpop.permute.xlu0 %446
    %v448 = vsel %vm144, %v445, 0
    %v450 = vsel %vm144, %v447, 0
    %452 = vmatpush.xpose.msra.mxu0 0.0
    %453 = vmatpush.xpose.msra.mxu0 0.0
    %454 = vmatpush.xpose.msra.mxu0 0.0
    %455 = vmatpush.xpose.msra.mxu0 0.0
    %456 = vmatpush.xpose.msra.mxu0 0.0
    %457 = vmatpush.xpose.msra.mxu0 0.0
    %458 = vmatpush.xpose.msra.mxu0 0.0
    %459 = vmatpush.xpose.msra.mxu0 0.0
    %460 = vmatpush.xpose.msra.mxu0 0.0
    %461 = vmatpush.xpose.msra.mxu0 0.0
    %462 = vmatpush.xpose.msra.mxu0 0.0
    %463 = vmatpush.xpose.msra.mxu0 0.0
    %464 = vmatpush.xpose.msra.mxu0 0.0
    %465 = vmatpush.xpose.msra.mxu0 0.0
    %466 = vmatpush.xpose.msra.mxu0 0.0
    %467 = vmatpush.xpose.msra.mxu0 %v450
    %468 = vmatmul.f32.gmra.mxu0 %v448
    %v469 = vpop.f32.mrf.mxu0
    %v470 = vadd.f32 0.0, %v469
    %471 = vdwg.mxu0
    %v472 = vmul.f32 %v442, 0.17677669
    %v473 = vmul.f32 %v470, 0.17677669
    %v474 = vsel %vm144, %v472, -inf
    %475 = vmax.xlane.f32.xlu0 %v474
    %v476 = vpop.xlane.xlu0 %475
    %v477 = vsel %vm144, %v473, -inf
    %478 = vmax.xlane.f32.xlu0 %v477
    %v479 = vpop.xlane.xlu0 %478
    %v480 = vsub.f32 %v472, %v476
    %v481 = vsub.f32 %v473, %v479
    %v482 = vmul.f32 %v480, 1.442695
    %v483 = vpow.pop %v482
    %v484 = vmul.f32 %v481, 1.442695
    %v485 = vpow.pop %v484
    %v486 = vsel %vm144, %v483, 0.0
    %487 = vadd.xlane.f32.xlu0 %v486
    %v488 = vpop.xlane.xlu0 %487
    %v489 = vsel %vm144, %v485, 0.0
    %490 = vadd.xlane.f32.xlu0 %v489
    %v491 = vpop.xlane.xlu0 %490
    %v492 = vrcp.pop %v488
    %v493 = vrcp.pop %v491
    %v494 = vmul.f32 %v488, %v492
    %v495 = vmul.f32 %v491, %v493
    %v496 = vsub.f32 2.0, %v494
    %v497 = vsub.f32 2.0, %v495
    %v498 = vmul.f32 %v492, %v496
    %v499 = vmul.f32 %v493, %v497
    %v500 = vmul.f32 %v483, %v498
    %v501 = vmul.f32 %v485, %v499
    %502 = vrot.lane.b32.xlu0 %v136, 48
    %v503 = vpop.permute.xlu0 %502
    %v506 = vsel %vm144, %v500, 0
    %508 = vmatpush.msra.mxu0 0.0
    %509 = vmatpush.msra.mxu0 0.0
    %510 = vmatpush.msra.mxu0 0.0
    %511 = vmatpush.msra.mxu0 0.0
    %512 = vmatpush.msra.mxu0 0.0
    %513 = vmatpush.msra.mxu0 0.0
    %514 = vmatpush.msra.mxu0 0.0
    %515 = vmatpush.msra.mxu0 0.0
    %516 = vmatpush.msra.mxu0 0.0
    %517 = vmatpush.msra.mxu0 0.0
    %518 = vmatpush.msra.mxu0 0.0
    %519 = vmatpush.msra.mxu0 0.0
    %520 = vmatpush.msra.mxu0 0.0
    %521 = vmatpush.msra.mxu0 0.0
    %522 = vmatpush.msra.mxu0 0.0
    %523 = vmatpush.msra.mxu0 %v503
    %524 = vmatmul.f32.gmra.mxu0 %v506
    %v525 = vpop.f32.mrf.mxu0
    %v526 = vadd.f32 0.0, %v525
    %527 = vdwg.mxu0
    %528 = vrot.lane.b32.xlu0 %v139, 48
    %v529 = vpop.permute.xlu0 %528
    %v532 = vsel %vm144, %v501, 0
    %534 = vmatpush.msra.mxu0 0.0
    %535 = vmatpush.msra.mxu0 0.0
    %536 = vmatpush.msra.mxu0 0.0
    %537 = vmatpush.msra.mxu0 0.0
    %538 = vmatpush.msra.mxu0 0.0
    %539 = vmatpush.msra.mxu0 0.0
    %540 = vmatpush.msra.mxu0 0.0
    %541 = vmatpush.msra.mxu0 0.0
    %542 = vmatpush.msra.mxu0 0.0
    %543 = vmatpush.msra.mxu0 0.0
    %544 = vmatpush.msra.mxu0 0.0
    %545 = vmatpush.msra.mxu0 0.0
    %546 = vmatpush.msra.mxu0 0.0
    %547 = vmatpush.msra.mxu0 0.0
    %548 = vmatpush.msra.mxu0 0.0
    %549 = vmatpush.msra.mxu0 %v529
    %550 = vmatmul.f32.gmra.mxu0 %v532
    %v551 = vpop.f32.mrf.mxu0
    %v552 = vadd.f32 0.0, %v551
    %553 = vdwg.mxu0
    %554 = vrot.lane.b32.xlu0 %v136, 104
    %v555 = vpop.permute.xlu0 %554
    %556 = vrot.lane.b32.xlu0 %v136, 72
    %v557 = vpop.permute.xlu0 %556
    %v558 = vsel %vm144, %v555, 0
    %v560 = vsel %vm144, %v557, 0
    %562 = vmatpush.xpose.msra.mxu0 0.0
    %563 = vmatpush.xpose.msra.mxu0 0.0
    %564 = vmatpush.xpose.msra.mxu0 0.0
    %565 = vmatpush.xpose.msra.mxu0 0.0
    %566 = vmatpush.xpose.msra.mxu0 0.0
    %567 = vmatpush.xpose.msra.mxu0 0.0
    %568 = vmatpush.xpose.msra.mxu0 0.0
    %569 = vmatpush.xpose.msra.mxu0 0.0
    %570 = vmatpush.xpose.msra.mxu0 0.0
    %571 = vmatpush.xpose.msra.mxu0 0.0
    %572 = vmatpush.xpose.msra.mxu0 0.0
    %573 = vmatpush.xpose.msra.mxu0 0.0
    %574 = vmatpush.xpose.msra.mxu0 0.0
    %575 = vmatpush.xpose.msra.mxu0 0.0
    %576 = vmatpush.xpose.msra.mxu0 0.0
    %577 = vmatpush.xpose.msra.mxu0 %v560
    %578 = vmatmul.f32.gmra.mxu0 %v558
    %v579 = vpop.f32.mrf.mxu0
    %v580 = vadd.f32 0.0, %v579
    %581 = vdwg.mxu0
    %582 = vrot.lane.b32.xlu0 %v139, 104
    %v583 = vpop.permute.xlu0 %582
    %584 = vrot.lane.b32.xlu0 %v139, 72
    %v585 = vpop.permute.xlu0 %584
    %v586 = vsel %vm144, %v583, 0
    %v588 = vsel %vm144, %v585, 0
    %590 = vmatpush.xpose.msra.mxu0 0.0
    %591 = vmatpush.xpose.msra.mxu0 0.0
    %592 = vmatpush.xpose.msra.mxu0 0.0
    %593 = vmatpush.xpose.msra.mxu0 0.0
    %594 = vmatpush.xpose.msra.mxu0 0.0
    %595 = vmatpush.xpose.msra.mxu0 0.0
    %596 = vmatpush.xpose.msra.mxu0 0.0
    %597 = vmatpush.xpose.msra.mxu0 0.0
    %598 = vmatpush.xpose.msra.mxu0 0.0
    %599 = vmatpush.xpose.msra.mxu0 0.0
    %600 = vmatpush.xpose.msra.mxu0 0.0
    %601 = vmatpush.xpose.msra.mxu0 0.0
    %602 = vmatpush.xpose.msra.mxu0 0.0
    %603 = vmatpush.xpose.msra.mxu0 0.0
    %604 = vmatpush.xpose.msra.mxu0 0.0
    %605 = vmatpush.xpose.msra.mxu0 %v588
    %606 = vmatmul.f32.gmra.mxu0 %v586
    %v607 = vpop.f32.mrf.mxu0
    %v608 = vadd.f32 0.0, %v607
    %609 = vdwg.mxu0
    %v610 = vmul.f32 %v580, 0.17677669
    %v611 = vmul.f32 %v608, 0.17677669
    %v612 = vsel %vm144, %v610, -inf
    %613 = vmax.xlane.f32.xlu0 %v612
    %v614 = vpop.xlane.xlu0 %613
    %v615 = vsel %vm144, %v611, -inf
    %616 = vmax.xlane.f32.xlu0 %v615
    %v617 = vpop.xlane.xlu0 %616
    %v618 = vsub.f32 %v610, %v614
    %v619 = vsub.f32 %v611, %v617
    %v620 = vmul.f32 %v618, 1.442695
    %v621 = vpow.pop %v620
    %v622 = vmul.f32 %v619, 1.442695
    %v623 = vpow.pop %v622
    %v624 = vsel %vm144, %v621, 0.0
    %625 = vadd.xlane.f32.xlu0 %v624
    %v626 = vpop.xlane.xlu0 %625
    %v627 = vsel %vm144, %v623, 0.0
    %628 = vadd.xlane.f32.xlu0 %v627
    %v629 = vpop.xlane.xlu0 %628
    %v630 = vrcp.pop %v626
    %v631 = vrcp.pop %v629
    %v632 = vmul.f32 %v626, %v630
    %v633 = vmul.f32 %v629, %v631
    %v634 = vsub.f32 2.0, %v632
    %v635 = vsub.f32 2.0, %v633
    %v636 = vmul.f32 %v630, %v634
    %v637 = vmul.f32 %v631, %v635
    %v638 = vmul.f32 %v621, %v636
    %v639 = vmul.f32 %v623, %v637
    %640 = vrot.lane.b32.xlu0 %v136, 40
    %v641 = vpop.permute.xlu0 %640
    %v644 = vsel %vm144, %v638, 0
    %646 = vmatpush.msra.mxu0 0.0
    %647 = vmatpush.msra.mxu0 0.0
    %648 = vmatpush.msra.mxu0 0.0
    %649 = vmatpush.msra.mxu0 0.0
    %650 = vmatpush.msra.mxu0 0.0
    %651 = vmatpush.msra.mxu0 0.0
    %652 = vmatpush.msra.mxu0 0.0
    %653 = vmatpush.msra.mxu0 0.0
    %654 = vmatpush.msra.mxu0 0.0
    %655 = vmatpush.msra.mxu0 0.0
    %656 = vmatpush.msra.mxu0 0.0
    %657 = vmatpush.msra.mxu0 0.0
    %658 = vmatpush.msra.mxu0 0.0
    %659 = vmatpush.msra.mxu0 0.0
    %660 = vmatpush.msra.mxu0 0.0
    %661 = vmatpush.msra.mxu0 %v641
    %662 = vmatmul.f32.gmra.mxu0 %v644
    %v663 = vpop.f32.mrf.mxu0
    %v664 = vadd.f32 0.0, %v663
    %665 = vdwg.mxu0
    %666 = vrot.lane.b32.xlu0 %v139, 40
    %v667 = vpop.permute.xlu0 %666
    %v670 = vsel %vm144, %v639, 0
    %672 = vmatpush.msra.mxu0 0.0
    %673 = vmatpush.msra.mxu0 0.0
    %674 = vmatpush.msra.mxu0 0.0
    %675 = vmatpush.msra.mxu0 0.0
    %676 = vmatpush.msra.mxu0 0.0
    %677 = vmatpush.msra.mxu0 0.0
    %678 = vmatpush.msra.mxu0 0.0
    %679 = vmatpush.msra.mxu0 0.0
    %680 = vmatpush.msra.mxu0 0.0
    %681 = vmatpush.msra.mxu0 0.0
    %682 = vmatpush.msra.mxu0 0.0
    %683 = vmatpush.msra.mxu0 0.0
    %684 = vmatpush.msra.mxu0 0.0
    %685 = vmatpush.msra.mxu0 0.0
    %686 = vmatpush.msra.mxu0 0.0
    %687 = vmatpush.msra.mxu0 %v667
    %688 = vmatmul.f32.gmra.mxu0 %v670
    %v689 = vpop.f32.mrf.mxu0
    %v690 = vadd.f32 0.0, %v689
    %691 = vdwg.mxu0
    %694 = vrot.lane.b32.xlu0 %v388, 8
    %v695 = vpop.permute.xlu0 %694
    %696 = vrot.lane.b32.xlu0 %v414, 8
    %v697 = vpop.permute.xlu0 %696
    %702 = vrot.lane.b32.xlu0 %v526, 16
    %v703 = vpop.permute.xlu0 %702
    %704 = vrot.lane.b32.xlu0 %v552, 16
    %v705 = vpop.permute.xlu0 %704
    %710 = vrot.lane.b32.xlu0 %v664, 24
    %v711 = vpop.permute.xlu0 %710
    %712 = vrot.lane.b32.xlu0 %v690, 24
    %v713 = vpop.permute.xlu0 %712
    %v716 = vsel %vm144, %v250, %v695
    %v717 = vsel %vm144, %v276, %v697
    %vm718 = vcmask 130048
    %v719 = vsel %vm718, %v716, %v703
    %v720 = vsel %vm718, %v717, %v705
    %vm721 = vcmask 195584
    %v722 = vsel %vm721, %v719, %v711
    %v723 = vsel %vm721, %v720, %v713
    %v724 = vld [vmem:[%s2] sm:$0xff]
    %v725 = vld [vmem:[%s2 + $0x8] sm:$0xff]
    %v726 = vld [vmem:[%s2 + $0x10] sm:$0xff]
    %v727 = vld [vmem:[%s2 + $0x18] sm:$0xff]
    %v728 = vld [vmem:[%s3] sm:$0x1]
    %v730 = vperm.slane %v728, 0
    %v733 = vsel %vm46, %v722, 0
    %v736 = vsel %vm46, %v723, 0
    %738 = vmatpush.msra.mxu0 0.0
    %739 = vmatpush.msra.mxu0 0.0
    %740 = vmatpush.msra.mxu0 0.0
    %741 = vmatpush.msra.mxu0 0.0
    %742 = vmatpush.msra.mxu0 0.0
    %743 = vmatpush.msra.mxu0 0.0
    %744 = vmatpush.msra.mxu0 0.0
    %745 = vmatpush.msra.mxu0 0.0
    %746 = vmatpush.msra.mxu0 0.0
    %747 = vmatpush.msra.mxu0 0.0
    %748 = vmatpush.msra.mxu0 0.0
    %749 = vmatpush.msra.mxu0 0.0
    %750 = vmatpush.msra.mxu0 %v727
    %751 = vmatpush.msra.mxu0 %v726
    %752 = vmatpush.msra.mxu0 %v725
    %753 = vmatpush.msra.mxu0 %v724
    %754 = vmatmul.f32.gmra.mxu0 %v733
    %v755 = vpop.f32.mrf.mxu0
    %v756 = vadd.f32 %v730, %v755
    %757 = vmatmul.f32.gmra.mxu0 %v736
    %v758 = vpop.f32.mrf.mxu0
    %v759 = vadd.f32 %v730, %v758
    %760 = vdwg.mxu0
    %v761 = vadd.f32 %v106, %v756
    %v762 = vadd.f32 %v107, %v759
    %v763 = vld [vmem:[%s10] sm:$0x1]
    %v764 = vld [vmem:[%s11] sm:$0x1]
    %v765 = vsel %vm46, %v761, 0.0
    %766 = vadd.xlane.f32.xlu0 %v765
    %v767 = vpop.xlane.xlu0 %766
    %v768 = vsel %vm46, %v762, 0.0
    %769 = vadd.xlane.f32.xlu0 %v768
    %v770 = vpop.xlane.xlu0 %769
    %v771 = vmul.f32 %v767, %v59
    %v772 = vmul.f32 %v770, %v59
    %v773 = vsub.f32 %v761, %v771
    %v774 = vsub.f32 %v762, %v772
    %v775 = vmul.f32 %v773, %v773
    %v776 = vmul.f32 %v774, %v774
    %v777 = vsel %vm46, %v775, 0.0
    %778 = vadd.xlane.f32.xlu0 %v777
    %v779 = vpop.xlane.xlu0 %778
    %v780 = vsel %vm46, %v776, 0.0
    %781 = vadd.xlane.f32.xlu0 %v780
    %v782 = vpop.xlane.xlu0 %781
    %v783 = vmul.f32 %v779, %v59
    %v784 = vmul.f32 %v782, %v59
    %v785 = vadd.f32 %v783, 1e-05
    %v786 = vadd.f32 %v784, 1e-05
    %v787 = vrsqrt.pop %v785
    %v788 = vmul.f32 %v787, %v785
    %v789 = vmul.f32 %v788, %v787
    %v790 = vmul.f32 0.5, %v789
    %v791 = vsub.f32 1.5, %v790
    %v792 = vmul.f32 %v787, %v791
    %vm793 = vweird.f32 %v785
    %vm794 = vweird.f32 %v787
    %vm795 = vmor %vm793, %vm794
    %v796 = vsel %vm795, %v787, %v792
    %v797 = vrsqrt.pop %v786
    %v798 = vmul.f32 %v797, %v786
    %v799 = vmul.f32 %v798, %v797
    %v800 = vmul.f32 0.5, %v799
    %v801 = vsub.f32 1.5, %v800
    %v802 = vmul.f32 %v797, %v801
    %vm803 = vweird.f32 %v786
    %vm804 = vweird.f32 %v797
    %vm805 = vmor %vm803, %vm804
    %v806 = vsel %vm805, %v797, %v802
    %v807 = vmul.f32 %v773, %v796
    %v808 = vmul.f32 %v774, %v806
    %v810 = vperm.slane %v763, 0
    %v812 = vmul.f32 %v807, %v810
    %v813 = vmul.f32 %v808, %v810
    %v815 = vperm.slane %v764, 0
    %v817 = vadd.f32 %v812, %v815
    %v818 = vadd.f32 %v813, %v815
    %v819 = vld [vmem:[%s4] sm:$0xff]
    %v820 = vld [vmem:[%s4 + $0x8] sm:$0xff]
    %v821 = vld [vmem:[%s4 + $0x10] sm:$0xff]
    %v822 = vld [vmem:[%s4 + $0x18] sm:$0xff]
    %v823 = vld [vmem:[%s5] sm:$0x1]
    %v825 = vperm.slane %v823, 0
    %v828 = vsel %vm46, %v817, 0
    %v831 = vsel %vm46, %v818, 0
    %833 = vmatpush.msra.mxu0 0.0
    %834 = vmatpush.msra.mxu0 0.0
    %835 = vmatpush.msra.mxu0 0.0
    %836 = vmatpush.msra.mxu0 0.0
    %837 = vmatpush.msra.mxu0 0.0
    %838 = vmatpush.msra.mxu0 0.0
    %839 = vmatpush.msra.mxu0 0.0
    %840 = vmatpush.msra.mxu0 0.0
    %841 = vmatpush.msra.mxu0 0.0
    %842 = vmatpush.msra.mxu0 0.0
    %843 = vmatpush.msra.mxu0 0.0
    %844 = vmatpush.msra.mxu0 0.0
    %845 = vmatpush.msra.mxu0 %v822
    %846 = vmatpush.msra.mxu0 %v821
    %847 = vmatpush.msra.mxu0 %v820
    %848 = vmatpush.msra.mxu0 %v819
    %849 = vmatmul.f32.gmra.mxu0 %v828
    %v850 = vpop.f32.mrf.mxu0
    %v851 = vadd.f32 %v825, %v850
    %852 = vmatmul.f32.gmra.mxu0 %v831
    %v853 = vpop.f32.mrf.mxu0
    %v854 = vadd.f32 %v825, %v853
    %855 = vdwg.mxu0
    %v856 = vmul.f32 %v851, 0.5
    %v857 = vmul.f32 %v854, 0.5
    %v858 = vmul.f32 %v851, 0.70710677
    %v859 = vmul.f32 %v854, 0.70710677
    %vm860 = vcmp.ge.f32.partialorder %v858, 0.0
    %vm861 = vcmp.ge.f32.partialorder %v859, 0.0
    %v862 = vsel %vm860, 1.0, -1.0
    %v863 = vsel %vm861, 1.0, -1.0
    %v864 = vand.u32 2147483647, %v858
    %v865 = vand.u32 2147483647, %v859
    %v866 = vmul.f32 %v864, 0.3275911
    %v867 = vmul.f32 %v865, 0.3275911
    %v868 = vadd.f32 %v866, 1.0
    %v869 = vadd.f32 %v867, 1.0
    %v870 = vrcp.pop %v868
    %v871 = vrcp.pop %v869
    %v872 = vmul.f32 %v868, %v870
    %v873 = vmul.f32 %v869, %v871
    %v874 = vsub.f32 2.0, %v872
    %v875 = vsub.f32 2.0, %v873
    %v876 = vmul.f32 %v870, %v874
    %v877 = vmul.f32 %v871, %v875
    %v878 = vmul.f32 %v876, 1.0614054
    %v879 = vmul.f32 %v877, 1.0614054
    %v880 = vadd.f32 %v878, -1.4531521
    %v881 = vadd.f32 %v879, -1.4531521
    %v882 = vmul.f32 %v880, %v876
    %v883 = vmul.f32 %v881, %v877
    %v884 = vadd.f32 %v882, 1.4214138
    %v885 = vadd.f32 %v883, 1.4214138
    %v886 = vmul.f32 %v884, %v876
    %v887 = vmul.f32 %v885, %v877
    %v888 = vadd.f32 %v886, -0.28449672
    %v889 = vadd.f32 %v887, -0.28449672
    %v890 = vmul.f32 %v888, %v876
    %v891 = vmul.f32 %v889, %v877
    %v892 = vadd.f32 %v890, 0.2548296
    %v893 = vadd.f32 %v891, 0.2548296
    %v894 = vmul.f32 %v892, %v876
    %v895 = vmul.f32 %v893, %v877
    %v896 = vsub.f32 0.0, %v864
    %v897 = vsub.f32 0.0, %v865
    %v898 = vmul.f32 %v896, %v864
    %v899 = vmul.f32 %v897, %v865
    %v900 = vmul.f32 %v898, 1.442695
    %v901 = vpow.pop %v900
    %v902 = vmul.f32 %v899, 1.442695
    %v903 = vpow.pop %v902
    %v904 = vmul.f32 %v894, %v901
    %v905 = vmul.f32 %v895, %v903
    %v906 = vsub.f32 1.0, %v904
    %v907 = vsub.f32 1.0, %v905
    %v908 = vmul.f32 %v862, %v906
    %v909 = vmul.f32 %v863, %v907
    %v910 = vadd.f32 %v908, 1.0
    %v911 = vadd.f32 %v909, 1.0
    %v912 = vmul.f32 %v856, %v910
    %v913 = vmul.f32 %v857, %v911
    %v914 = vld [vmem:[%s6] sm:$0xff]
    %v915 = vld [vmem:[%s6 + $0x8] sm:$0xff]
    %v916 = vld [vmem:[%s6 + $0x10] sm:$0xff]
    %v917 = vld [vmem:[%s6 + $0x18] sm:$0xff]
    %v918 = vld [vmem:[%s6 + $0x20] sm:$0xff]
    %v919 = vld [vmem:[%s6 + $0x28] sm:$0xff]
    %v920 = vld [vmem:[%s6 + $0x30] sm:$0xff]
    %v921 = vld [vmem:[%s6 + $0x38] sm:$0xff]
    %v922 = vld [vmem:[%s6 + $0x40] sm:$0xff]
    %v923 = vld [vmem:[%s6 + $0x48] sm:$0xff]
    %v924 = vld [vmem:[%s6 + $0x50] sm:$0xff]
    %v925 = vld [vmem:[%s6 + $0x58] sm:$0xff]
    %v926 = vld [vmem:[%s6 + $0x60] sm:$0xff]
    %v927 = vld [vmem:[%s6 + $0x68] sm:$0xff]
    %v928 = vld [vmem:[%s6 + $0x70] sm:$0xff]
    %v929 = vld [vmem:[%s6 + $0x78] sm:$0xff]
    %v930 = vld [vmem:[%s7] sm:$0x1]
    %v932 = vperm.slane %v930, 0
    %934 = vmatpush.msra.mxu0 %v929
    %935 = vmatpush.msra.mxu0 %v928
    %936 = vmatpush.msra.mxu0 %v927
    %937 = vmatpush.msra.mxu0 %v926
    %938 = vmatpush.msra.mxu0 %v925
    %939 = vmatpush.msra.mxu0 %v924
    %940 = vmatpush.msra.mxu0 %v923
    %941 = vmatpush.msra.mxu0 %v922
    %942 = vmatpush.msra.mxu0 %v921
    %943 = vmatpush.msra.mxu0 %v920
    %944 = vmatpush.msra.mxu0 %v919
    %945 = vmatpush.msra.mxu0 %v918
    %946 = vmatpush.msra.mxu0 %v917
    %947 = vmatpush.msra.mxu0 %v916
    %948 = vmatpush.msra.mxu0 %v915
    %949 = vmatpush.msra.mxu0 %v914
    %950 = vmatmul.f32.gmra.mxu0 %v912
    %v951 = vpop.f32.mrf.mxu0
    %v952 = vadd.f32 %v932, %v951
    %953 = vmatmul.f32.gmra.mxu0 %v913
    %v954 = vpop.f32.mrf.mxu0
    %v955 = vadd.f32 %v932, %v954
    %956 = vdwg.mxu0
    %v957 = vadd.f32 %v817, %v952
    %v958 = vadd.f32 %v818, %v955
    %959 = vst.msk [vmem:[#allocation2] sm:$0xff] %vm46, %v957
    %960 = vst.msk [vmem:[#allocation2 + $0x8] sm:$0xff] %vm46, %v958
    // Predicated region
    $region50: #{tpu_custom_call.1} parent=1 // pred_check
      _
    $region51: #{tpu_custom_call.1} parent=1 // pred_check_branch
      %962 = sbr.rel (0) target = $region53
    $region52: #{tpu_custom_call.1} parent=1 // pred_region
      %964 = vsyncadd [#allocation3], 0
      %s965 = sshll.u32 [#allocation2], 4
      %s966 = int_to_ptr.vmem [resolvable:$true] %s965
      %s967 = sshll.u32 %s12, 4
      %s968 = int_to_ptr.hbm [resolvable:$true] %s967
      %973 = dma.vmem_to_hbm [thread:$0]  %s966, 256, %s968, [#allocation3], 128, 128, 8
    $region53: #{tpu_custom_call.1} parent=1 // pred_fallthru
      _
    // Predicated region
    $region54: #{tpu_custom_call.1} parent=1 // pred_check
      _
    $region55: #{tpu_custom_call.1} parent=1 // pred_check_branch
      %975 = sbr.rel (0) target = $region57
    $region56: #{tpu_custom_call.1} parent=1 // pred_region
      %977 = dma.done [#allocation3], 256
    $region57: #{tpu_custom_call.1} parent=1 // pred_fallthru
      _
    %978 = vsyncpa [#allocation3], 1

</llo_original>
